<compile_context>
chip_gen: v6e
topology: v6e:2x2x1
jax: 0.10.0
libtpu: 0.0.40
codegen_flags: <defaults>
</compile_context>

<pallas_src>
import jax
import jax.numpy as jnp
from jax import lax
from jax.experimental import pallas as pl
from jax.experimental.pallas import tpu as pltpu

MASK_BIAS = -1e30


def _round_up(x, m):
    return -(-x // m) * m


def _tensorcores_per_chip():
    try:
        kind = jax.devices()[0].device_kind.lower()
    except Exception:
        return 1
    return 2 if "v7" in kind else 1


def _vmem_block_bytes(TB, Tp, Tpk, A, Fenc, K, mem_itemsize):
    f32b = 4
    in_bytes = (TB * 2 * Tpk * f32b              # attention-weight block (f32)
                + TB * A * Tp * mem_itemsize     # processed_memory^T block
                + TB * A * f32b                  # processed query block
                + TB * Tp * Fenc * mem_itemsize  # memory block
                + TB * Tp * f32b                 # mask-bias block
                + A * 2 * K * f32b + A * f32b)   # folded weight + v
    out_bytes = TB * Fenc * f32b + TB * Tp * f32b
    # rough bound on in-kernel intermediates (x2k, paw, tanh, probs)
    inter = TB * 2 * K * Tp * f32b + 3 * TB * A * Tp * f32b + 3 * TB * Tp * f32b
    return 2 * (in_bytes + out_bytes) + inter    # x2 for double-buffering


def _pick_blocking(B, two_tc, tb_max, *, Tp, Tpk, A, Fenc, K, mem_itemsize, budget):
    # v7x (2 TCs): >=2 even grid steps so "parallel" shards across cores.
    # v5e/v6e (1 TC): the grid is a serial loop -> fewest, largest blocks.
    num_blocks = 2 if (two_tc and B >= 2) else 1
    TB = min(_round_up(-(-B // num_blocks), 8), max(8, _round_up(tb_max, 8)))
    while TB > 8 and _vmem_block_bytes(TB, Tp, Tpk, A, Fenc, K, mem_itemsize) > budget:
        TB -= 8
    num_blocks = max(num_blocks, -(-B // TB))
    if two_tc and num_blocks > 1 and num_blocks % 2:
        num_blocks += 1            # even step count keeps both v7x TCs busy
    return num_blocks, TB


def attention_kernel(x_ref, pmt_ref, pq_ref, mem_ref, bias_ref, wt_ref, v_ref,
                     ctx_ref, attw_ref):
    """One batch block.

    x_ref    : (TB, 2, Tp+K-1) f32       prev/cum attention weights (time-haloed)
    pmt_ref  : (TB, A, Tp)     mem_dtype processed_memory, transposed
    pq_ref   : (TB, A, 1)      f32       processed query (query @ Wq^T)
    mem_ref  : (TB, Tp, Fenc)  mem_dtype encoder memory
    bias_ref : (TB, Tp)        f32       additive mask bias (0 / -1e30)
    wt_ref   : (A, 2K)         f32       conv1d folded into location_dense (transposed)
    v_ref    : (A, 1)          f32       v weight
    ctx_ref  : (TB, Fenc)      f32       attention context (out)
    attw_ref : (TB, Tp)        f32       attention weights (out)
    """
    f32 = jnp.float32
    TB, A, Tp = pmt_ref.shape
    K2 = wt_ref.shape[1]
    K = K2 // 2
    assert x_ref.shape[2] == Tp + K - 1

    # In-kernel im2col (no (B, T, 2K) HBM materialization): tap k is a static
    # lane slice; taps stacked on the sublane axis in (k, c)-major order.
    xc = x_ref[...]                                                  # (TB, 2, Tp+K-1)
    x2k = jnp.concatenate([xc[:, :, k:k + Tp] for k in range(K)], axis=1)  # (TB,2K,Tp)

    # Fused location conv1d + location_dense as one MXU matmul per row,
    # producing (A, Tp) so Tp stays on the lane axis.
    wb = jnp.broadcast_to(wt_ref[...][None], (TB, A, K2))            # (TB, A, 2K)
    paw = lax.dot_general(wb, x2k, (((2,), (1,)), ((0,), (0,))),
                          preferred_element_type=f32)                # (TB, A, Tp)

    # energies[b, t] = v . tanh(paw + processed_memory + processed_query)
    e = jnp.tanh(paw + pmt_ref[...].astype(f32) + pq_ref[...])       # (TB, A, Tp)
    energies = jnp.sum(e * v_ref[...][None], axis=1)                 # (TB, Tp)
    energies = energies + bias_ref[...]                              # masked -> -1e30

    # Softmax over time (lane-dense rows).
    m = jnp.max(energies, axis=-1, keepdims=True)                    # (TB, 1)
    p = jnp.exp(energies - m)
    denom = jnp.sum(p, axis=-1, keepdims=True)
    r = pl.reciprocal(denom, approx=True)                            # EUP slot
    r = r * (2.0 - denom * r)                                        # one Newton step
    w = p * r                                                        # (TB, Tp)
    attw_ref[...] = w

    # Context: batched (1, Tp) @ (Tp, Fenc) MXU matmuls, f32 accumulation.
    wq = w.astype(mem_ref.dtype)[:, None, :]                         # (TB, 1, Tp)
    ctx = jnp.einsum('bqt,btf->bqf', wq, mem_ref[...],
                     preferred_element_type=f32)                     # (TB, 1, Fenc)
    ctx_ref[...] = ctx[:, 0, :]


def prepare_attention_state(memory, processed_memory, mask, params, *,
                            mem_dtype=jnp.bfloat16, tb_max=32):
    """One-time (per utterance) setup of the step-invariant attention state.

    Call this OUTSIDE the autoregressive decoder loop: it pads / transposes /
    casts the large encoder-side tensors exactly once so `attention_step`
    only touches the small per-step tensors.
    """
    f32 = jnp.float32
    conv_w = jnp.asarray(params["conv_w"], f32)      # (Fconv, 2, K)
    loc_w = jnp.asarray(params["loc_w"], f32)        # (A, Fconv)
    q_w = jnp.asarray(params["q_w"], f32)            # (A, H)
    v_w = jnp.asarray(params["v_w"], f32)            # (1, A)

    B, T, A = processed_memory.shape
    Fenc = memory.shape[2]
    Fconv, _, K = conv_w.shape
    pad = (K - 1) // 2

    Tp = _round_up(T, 128)          # lane-dense energies/softmax/attw rows
    Tpk = Tp + 2 * pad              # time extent incl. conv halo

    two_tc = _tensorcores_per_chip() >= 2
    mem_itemsize = jnp.dtype(mem_dtype).itemsize
    budget = (48 << 20) if two_tc else (96 << 20)    # v7x: 64 MiB VMEM per TC
    num_blocks, TB = _pick_blocking(B, two_tc, tb_max, Tp=Tp, Tpk=Tpk, A=A,
                                    Fenc=Fenc, K=K, mem_itemsize=mem_itemsize,
                                    budget=budget)
    B_pad = num_blocks * TB
    pad_b, pad_t = B_pad - B, Tp - T

    # Fold conv1d into location_dense; stored transposed so the in-kernel
    # matmul directly produces (A, Tp):
    #   w_fold_t[a, 2k+c] = sum_f conv_w[f, c, k] * loc_w[a, f]
    w_fold = jnp.dot(jnp.transpose(conv_w, (2, 1, 0)).reshape(2 * K, Fconv),
                     loc_w.T, precision=lax.Precision.HIGHEST)       # (2K, A)
    w_fold_t = jnp.asarray(w_fold.T, f32)                            # (A, 2K)
    v_col = v_w.reshape(A, 1)

    # processed_memory transposed to (B, A, Tp) so Tp stays on lanes in-kernel.
    pm_t = jnp.transpose(jnp.asarray(processed_memory, f32), (0, 2, 1))
    pm_t = jnp.pad(pm_t, ((0, pad_b), (0, 0), (0, pad_t))).astype(mem_dtype)

    mem = jnp.pad(jnp.asarray(memory, f32),
                  ((0, pad_b), (0, pad_t), (0, 0))).astype(mem_dtype)

    # Lane-dense additive mask bias; padded time columns / batch rows masked too.
    bias = jnp.where(mask, jnp.float32(MASK_BIAS), jnp.float32(0.0))
    bias = jnp.pad(bias, ((0, pad_b), (0, pad_t)), constant_values=MASK_BIAS)

    est = _vmem_block_bytes(TB, Tp, Tpk, A, Fenc, K, mem_itemsize)
    vmem_limit = int(min(max(2 * est, 32 << 20), budget))

    return dict(pm_t=pm_t, mem=mem, bias=bias, w_fold_t=w_fold_t, v_col=v_col,
                q_w=q_w, B=B, T=T, A=A, Fenc=Fenc, K=K, pad=pad, Tp=Tp,
                Tpk=Tpk, TB=TB, num_blocks=num_blocks, B_pad=B_pad,
                vmem_limit_bytes=vmem_limit)


def attention_step(query, attention_weights_cat, state):
    """One decoder-step attention forward (only step-varying tensors touched)."""
    f32 = jnp.float32
    B, T, A, Fenc = state["B"], state["T"], state["A"], state["Fenc"]
    K, pad = state["K"], state["pad"]
    Tp, Tpk = state["Tp"], state["Tpk"]
    TB, num_blocks, B_pad = state["TB"], state["num_blocks"], state["B_pad"]
    pad_b = B_pad - B

    # Query projection: one small XLA matmul, fed to the kernel as (B, A, 1).
    pq = jnp.dot(jnp.asarray(query, f32), state["q_w"].T,
                 precision=lax.Precision.HIGHEST)                    # (B, A)
    pq = jnp.pad(pq, ((0, pad_b), (0, 0)))[:, :, None]               # (B_pad, A, 1)

    # Prev/cum attention weights with the conv halo on each side of time.
    x = jnp.pad(jnp.asarray(attention_weights_cat, f32),
                ((0, pad_b), (0, 0), (pad, Tpk - pad - T)))          # (B_pad, 2, Tpk)

    mem_itemsize = jnp.dtype(state["mem"].dtype).itemsize
    flops = int(2 * B_pad * Tp * A * 2 * K          # fused conv+dense matmul
                + 4 * B_pad * Tp * A                # adds + v-dot
                + 2 * B_pad * Tp * Fenc             # context matmul
                + 8 * B_pad * Tp)                   # softmax
    transcendentals = int(B_pad * Tp * (A + 1))     # tanh + exp
    bytes_accessed = int(
        B_pad * 2 * Tpk * 4 + B_pad * A * 4
        + B_pad * A * Tp * mem_itemsize + B_pad * Tp * Fenc * mem_itemsize
        + B_pad * Tp * 4 + A * 2 * K * 4 + A * 4
        + B_pad * Fenc * 4 + B_pad * Tp * 4)

    ctx_pad, attw_pad = pl.pallas_call(
        attention_kernel,
        out_shape=(jax.ShapeDtypeStruct((B_pad, Fenc), f32),
                   jax.ShapeDtypeStruct((B_pad, Tp), f32)),
        grid_spec=pltpu.PrefetchScalarGridSpec(
            num_scalar_prefetch=0,
            grid=(num_blocks,),
            in_specs=[
                pl.BlockSpec((TB, 2, Tpk), lambda b: (b, 0, 0)),     # att weights
                pl.BlockSpec((TB, A, Tp), lambda b: (b, 0, 0)),      # processed_memory^T
                pl.BlockSpec((TB, A, 1), lambda b: (b, 0, 0)),       # processed query
                pl.BlockSpec((TB, Tp, Fenc), lambda b: (b, 0, 0)),   # memory
                pl.BlockSpec((TB, Tp), lambda b: (b, 0)),            # mask bias
                pl.BlockSpec((A, 2 * K), lambda b: (0, 0)),          # folded conv+dense
                pl.BlockSpec((A, 1), lambda b: (0, 0)),              # v
            ],
            out_specs=[
                pl.BlockSpec((TB, Fenc), lambda b: (b, 0)),
                pl.BlockSpec((TB, Tp), lambda b: (b, 0)),
            ],
        ),
        compiler_params=pltpu.CompilerParams(
            dimension_semantics=("parallel",),
            vmem_limit_bytes=state["vmem_limit_bytes"]),
        cost_estimate=pl.CostEstimate(flops=flops,
                                      transcendentals=transcendentals,
                                      bytes_accessed=bytes_accessed),
    )(x, state["pm_t"], pq, state["mem"], state["bias"],
      state["w_fold_t"], state["v_col"])

    return ctx_pad[:B], attw_pad[:B, :T]


def attention_reference(query, memory, processed_memory, attention_weights_cat,
                        mask, params):
    """Pure-JAX reference mirroring the PyTorch forward semantics."""
    with jax.default_matmul_precision("float32"):
        conv_w, loc_w, q_w, v_w = (params["conv_w"], params["loc_w"],
                                   params["q_w"], params["v_w"])
        K = conv_w.shape[2]
        pad = (K - 1) // 2
        conv = lax.conv_general_dilated(
            attention_weights_cat, conv_w, (1,), [(pad, pad)],
            dimension_numbers=("NCH", "OIH", "NCH"))                 # (B, Fconv, T)
        paw = jnp.einsum("bft,af->bta", conv, loc_w)                 # (B, T, A)
        pq = jnp.einsum("bh,ah->ba", query, q_w)[:, None, :]         # (B, 1, A)
        e = jnp.tanh(pq + paw + processed_memory)                    # (B, T, A)
        energies = jnp.einsum("bta,a->bt", e, v_w[0])                # (B, T)
        energies = jnp.where(mask, -jnp.inf, energies)
        w = jax.nn.softmax(energies, axis=1)
        ctx = jnp.einsum("bt,btf->bf", w, memory)
        return ctx, w


if __name__ == "__main__":
    # Small deterministic config (exercises Tp padding to 128 and batch pad).
    B = 5                 # batch
    H = 32                # attention_rnn_dim
    Fenc = 32             # embedding_dim (encoder feature dim)
    A = 16                # attention_dim
    Fconv = 8             # attention_location_n_filters
    K = 5                 # attention_location_kernel_size
    T = 48                # encoder time steps

    key = jax.random.PRNGKey(0)
    k = jax.random.split(key, 10)

    params = {
        "conv_w": 0.2 * jax.random.normal(k[0], (Fconv, 2, K), jnp.float32),
        "loc_w": 0.2 * jax.random.normal(k[1], (A, Fconv), jnp.float32),
        "q_w": 0.2 * jax.random.normal(k[2], (A, H), jnp.float32),
        "v_w": 0.2 * jax.random.normal(k[3], (1, A), jnp.float32),
    }
    # memory_layer of the PyTorch module is not used in forward() (processed_memory
    # is already an input), so it is intentionally not materialized here.

    query = jax.random.normal(k[4], (B, H), jnp.float32)
    memory = jax.random.normal(k[5], (B, T, Fenc), jnp.float32)
    processed_memory = jax.random.normal(k[6], (B, T, A), jnp.float32)
    prev_w = jax.nn.softmax(jax.random.normal(k[7], (B, T), jnp.float32), axis=-1)
    cum_w = jax.nn.softmax(jax.random.normal(k[8], (B, T), jnp.float32), axis=-1)
    attention_weights_cat = jnp.stack([prev_w, cum_w], axis=1)       # (B, 2, T)

    lengths = jnp.array([T, T - 7, 23, T, 11], dtype=jnp.int32)
    mask = jnp.arange(T)[None, :] >= lengths[:, None]                # (B, T) bool

    # ---- run 1: f32 storage of the encoder streams (exact path) ------------
    state32 = prepare_attention_state(memory, processed_memory, mask, params,
                                      mem_dtype=jnp.float32)
    step32 = jax.jit(lambda q, awc: attention_step(q, awc, state32))
    ctx32, attw32 = step32(query, attention_weights_cat)
    jax.block_until_ready((ctx32, attw32))

    ctx_ref, attw_ref = attention_reference(
        query, memory, processed_memory, attention_weights_cat, mask, params)
    assert jnp.allclose(ctx32, ctx_ref, atol=2e-3, rtol=2e-3), "f32 context mismatch"
    assert jnp.allclose(attw32, attw_ref, atol=2e-3, rtol=2e-3), "f32 weights mismatch"

    # ---- run 2: bf16 storage of the step-invariant encoder streams ---------
    state16 = prepare_attention_state(memory, processed_memory, mask, params,
                                      mem_dtype=jnp.bfloat16)
    step16 = jax.jit(lambda q, awc: attention_step(q, awc, state16))
    ctx16, attw16 = step16(query, attention_weights_cat)
    jax.block_until_ready((ctx16, attw16))

    # Compare against a reference fed the same bf16-rounded encoder streams.
    mem_r = memory.astype(jnp.bfloat16).astype(jnp.float32)
    pm_r = processed_memory.astype(jnp.bfloat16).astype(jnp.float32)
    ctx_ref16, attw_ref16 = attention_reference(
        query, mem_r, pm_r, attention_weights_cat, mask, params)
    assert jnp.allclose(ctx16, ctx_ref16, atol=3e-2, rtol=3e-2), "bf16 context mismatch"
    assert jnp.allclose(attw16, attw_ref16, atol=3e-2, rtol=3e-2), "bf16 weights mismatch"

    print("KERNEL_OK")
</pallas_src>

<mosaic_0001>
module attributes {stable_mosaic.version = 11 : i64} {
  func.func @attention_kernel(%arg0: i32, %arg1: memref<8x2x132xf32, #tpu.memory_space<vmem>>, %arg2: memref<8x16x128xf32, #tpu.memory_space<vmem>>, %arg3: memref<8x16x1xf32, #tpu.memory_space<vmem>>, %arg4: memref<8x128x32xf32, #tpu.memory_space<vmem>>, %arg5: memref<8x128xf32, #tpu.memory_space<vmem>>, %arg6: memref<16x10xf32, #tpu.memory_space<vmem>>, %arg7: memref<16x1xf32, #tpu.memory_space<vmem>>, %arg8: memref<8x32xf32, #tpu.memory_space<vmem>>, %arg9: memref<8x128xf32, #tpu.memory_space<vmem>>) attributes {dimension_semantics = [#tpu.dimension_semantics<parallel>], iteration_bounds = array<i64: 1>, scalar_prefetch = 0 : i64, scratch_operands = 0 : i64, tpu.core_type = #tpu.core_type<tc>, window_params = [{transform_indices = @transform_0, window_bounds = array<i64: 8, 2, 132>}, {transform_indices = @transform_1, window_bounds = array<i64: 8, 16, 128>}, {transform_indices = @transform_2, window_bounds = array<i64: 8, 16, 1>}, {transform_indices = @transform_3, window_bounds = array<i64: 8, 128, 32>}, {transform_indices = @transform_4, window_bounds = array<i64: 8, 128>}, {pipeline_mode = #tpu.pipeline_mode<synchronous>, transform_indices = @transform_5, window_bounds = array<i64: 16, 10>}, {pipeline_mode = #tpu.pipeline_mode<synchronous>, transform_indices = @transform_6, window_bounds = array<i64: 16, 1>}, {transform_indices = @transform_7, window_bounds = array<i64: 8, 32>}, {transform_indices = @transform_8, window_bounds = array<i64: 8, 128>}]} {
    %c0 = arith.constant 0 : index
    %c0_0 = arith.constant 0 : index
    %c0_1 = arith.constant 0 : index
    %0 = vector.load %arg1[%c0, %c0_0, %c0_1] : memref<8x2x132xf32, #tpu.memory_space<vmem>>, vector<8x2x132xf32>
    %1 = vector.extract_strided_slice %0 {offsets = [0, 0, 0], sizes = [8, 2, 128], strides = [1, 1, 1]} : vector<8x2x132xf32> to vector<8x2x128xf32>
    %2 = vector.extract_strided_slice %0 {offsets = [0, 0, 1], sizes = [8, 2, 128], strides = [1, 1, 1]} : vector<8x2x132xf32> to vector<8x2x128xf32>
    %3 = vector.extract_strided_slice %0 {offsets = [0, 0, 2], sizes = [8, 2, 128], strides = [1, 1, 1]} : vector<8x2x132xf32> to vector<8x2x128xf32>
    %4 = vector.extract_strided_slice %0 {offsets = [0, 0, 3], sizes = [8, 2, 128], strides = [1, 1, 1]} : vector<8x2x132xf32> to vector<8x2x128xf32>
    %5 = vector.extract_strided_slice %0 {offsets = [0, 0, 4], sizes = [8, 2, 128], strides = [1, 1, 1]} : vector<8x2x132xf32> to vector<8x2x128xf32>
    %6 = tpu.concatenate %1, %2, %3, %4, %5 in 1 : vector<8x2x128xf32>, vector<8x2x128xf32>, vector<8x2x128xf32>, vector<8x2x128xf32>, vector<8x2x128xf32> -> vector<8x10x128xf32>
    %c0_2 = arith.constant 0 : index
    %c0_3 = arith.constant 0 : index
    %7 = vector.load %arg6[%c0_2, %c0_3] : memref<16x10xf32, #tpu.memory_space<vmem>>, vector<16x10xf32>
    %8 = vector.shape_cast %7 : vector<16x10xf32> to vector<1x16x10xf32>
    %9 = vector.shape_cast %8 : vector<1x16x10xf32> to vector<1x16x10xf32>
    %10 = vector.broadcast %9 : vector<1x16x10xf32> to vector<8x16x10xf32>
    %cst = arith.constant dense<0.000000e+00> : vector<8x16x128xf32>
    %11 = tpu.matmul %10, %6, %cst {dimension_numbers = #tpu.dot_dimension_numbers<[2], [1], [1], [2], [0, 0, 0, 1, 1, 2], [0], [0]>} : vector<8x16x10xf32>, vector<8x10x128xf32>, vector<8x16x128xf32> -> vector<8x16x128xf32>
    %c0_4 = arith.constant 0 : index
    %c0_5 = arith.constant 0 : index
    %c0_6 = arith.constant 0 : index
    %12 = vector.load %arg2[%c0_4, %c0_5, %c0_6] : memref<8x16x128xf32, #tpu.memory_space<vmem>>, vector<8x16x128xf32>
    %13 = arith.addf %11, %12 : vector<8x16x128xf32>
    %c0_7 = arith.constant 0 : index
    %c0_8 = arith.constant 0 : index
    %c0_9 = arith.constant 0 : index
    %14 = vector.load %arg3[%c0_7, %c0_8, %c0_9] : memref<8x16x1xf32, #tpu.memory_space<vmem>>, vector<8x16x1xf32>
    %15 = vector.broadcast %14 : vector<8x16x1xf32> to vector<8x16x128xf32>
    %16 = arith.addf %13, %15 : vector<8x16x128xf32>
    %17 = math.tanh %16 : vector<8x16x128xf32>
    %c0_10 = arith.constant 0 : index
    %c0_11 = arith.constant 0 : index
    %18 = vector.load %arg7[%c0_10, %c0_11] : memref<16x1xf32, #tpu.memory_space<vmem>>, vector<16x1xf32>
    %19 = vector.shape_cast %18 : vector<16x1xf32> to vector<1x16x1xf32>
    %20 = vector.broadcast %19 : vector<1x16x1xf32> to vector<8x16x128xf32>
    %21 = arith.mulf %17, %20 : vector<8x16x128xf32>
    %cst_12 = arith.constant dense<0.000000e+00> : vector<8x128xf32>
    %22 = vector.multi_reduction <add>, %21, %cst_12 [1] : vector<8x16x128xf32> to vector<8x128xf32>
    %c0_13 = arith.constant 0 : index
    %c0_14 = arith.constant 0 : index
    %23 = vector.load %arg5[%c0_13, %c0_14] : memref<8x128xf32, #tpu.memory_space<vmem>>, vector<8x128xf32>
    %24 = arith.addf %22, %23 : vector<8x128xf32>
    %cst_15 = arith.constant dense<0xFF800000> : vector<8xf32>
    %25 = vector.multi_reduction <maximumf>, %24, %cst_15 [1] : vector<8x128xf32> to vector<8xf32>
    %26 = vector.shape_cast %25 : vector<8xf32> to vector<8x1xf32>
    %27 = vector.broadcast %26 : vector<8x1xf32> to vector<8x128xf32>
    %28 = arith.subf %24, %27 : vector<8x128xf32>
    %29 = math.exp %28 : vector<8x128xf32>
    %cst_16 = arith.constant dense<0.000000e+00> : vector<8xf32>
    %30 = vector.multi_reduction <add>, %29, %cst_16 [1] : vector<8x128xf32> to vector<8xf32>
    %31 = vector.shape_cast %30 : vector<8xf32> to vector<8x1xf32>
    %32 = tpu.reciprocal %31 {approx = true} : vector<8x1xf32> -> vector<8x1xf32>
    %33 = arith.mulf %31, %32 : vector<8x1xf32>
    %cst_17 = arith.constant 2.000000e+00 : f32
    %34 = vector.broadcast %cst_17 : f32 to vector<8x1xf32>
    %35 = arith.subf %34, %33 : vector<8x1xf32>
    %36 = arith.mulf %32, %35 : vector<8x1xf32>
    %37 = vector.broadcast %36 : vector<8x1xf32> to vector<8x128xf32>
    %38 = arith.mulf %29, %37 : vector<8x128xf32>
    %c0_18 = arith.constant 0 : index
    %c0_19 = arith.constant 0 : index
    %39 = vector.load %arg9[%c0_18, %c0_19] : memref<8x128xf32, #tpu.memory_space<vmem>>, vector<8x128xf32>
    tpu.vector_store %arg9[%c0_18, %c0_19], %38 {strides = array<i32>} : memref<8x128xf32, #tpu.memory_space<vmem>>, vector<8x128xf32>,
    %40 = vector.shape_cast %38 : vector<8x128xf32> to vector<8x1x128xf32>
    %c0_20 = arith.constant 0 : index
    %c0_21 = arith.constant 0 : index
    %c0_22 = arith.constant 0 : index
    %41 = vector.load %arg4[%c0_20, %c0_21, %c0_22] : memref<8x128x32xf32, #tpu.memory_space<vmem>>, vector<8x128x32xf32>
    "tpu.trace_start"() <{level = 10 : i32, message = "bqt,btf->bqf"}> : () -> ()
    %cst_23 = arith.constant dense<0.000000e+00> : vector<8x1x32xf32>
    %42 = tpu.matmul %40, %41, %cst_23 {dimension_numbers = #tpu.dot_dimension_numbers<[2], [1], [1], [2], [0, 0, 0, 1, 1, 2], [0], [0]>} : vector<8x1x128xf32>, vector<8x128x32xf32>, vector<8x1x32xf32> -> vector<8x1x32xf32>
    "tpu.trace_stop"() : () -> ()
    %43 = vector.shape_cast %42 : vector<8x1x32xf32> to vector<8x32xf32>
    %c0_24 = arith.constant 0 : index
    %c0_25 = arith.constant 0 : index
    %44 = vector.load %arg8[%c0_24, %c0_25] : memref<8x32xf32, #tpu.memory_space<vmem>>, vector<8x32xf32>
    tpu.vector_store %arg8[%c0_24, %c0_25], %43 {strides = array<i32>} : memref<8x32xf32, #tpu.memory_space<vmem>>, vector<8x32xf32>,
    return
  }
  func.func @transform_0(%arg0: i32) -> (i32, i32, i32) {
    %c0_i32 = arith.constant 0 : i32
    %c0_i32_0 = arith.constant 0 : i32
    %c0_i32_1 = arith.constant 0 : i32
    return %arg0, %c0_i32, %c0_i32_0 : i32, i32, i32
  }
  func.func @transform_1(%arg0: i32) -> (i32, i32, i32) {
    %c0_i32 = arith.constant 0 : i32
    %c0_i32_0 = arith.constant 0 : i32
    %c0_i32_1 = arith.constant 0 : i32
    return %arg0, %c0_i32, %c0_i32_0 : i32, i32, i32
  }
  func.func @transform_2(%arg0: i32) -> (i32, i32, i32) {
    %c0_i32 = arith.constant 0 : i32
    %c0_i32_0 = arith.constant 0 : i32
    %c0_i32_1 = arith.constant 0 : i32
    return %arg0, %c0_i32, %c0_i32_0 : i32, i32, i32
  }
  func.func @transform_3(%arg0: i32) -> (i32, i32, i32) {
    %c0_i32 = arith.constant 0 : i32
    %c0_i32_0 = arith.constant 0 : i32
    %c0_i32_1 = arith.constant 0 : i32
    return %arg0, %c0_i32, %c0_i32_0 : i32, i32, i32
  }
  func.func @transform_4(%arg0: i32) -> (i32, i32) {
    %c0_i32 = arith.constant 0 : i32
    %c0_i32_0 = arith.constant 0 : i32
    return %arg0, %c0_i32 : i32, i32
  }
  func.func @transform_5(%arg0: i32) -> (i32, i32) {
    %c0_i32 = arith.constant 0 : i32
    %c0_i32_0 = arith.constant 0 : i32
    %c0_i32_1 = arith.constant 0 : i32
    return %c0_i32, %c0_i32_0 : i32, i32
  }
  func.func @transform_6(%arg0: i32) -> (i32, i32) {
    %c0_i32 = arith.constant 0 : i32
    %c0_i32_0 = arith.constant 0 : i32
    %c0_i32_1 = arith.constant 0 : i32
    return %c0_i32, %c0_i32_0 : i32, i32
  }
  func.func @transform_7(%arg0: i32) -> (i32, i32) {
    %c0_i32 = arith.constant 0 : i32
    %c0_i32_0 = arith.constant 0 : i32
    return %arg0, %c0_i32 : i32, i32
  }
  func.func @transform_8(%arg0: i32) -> (i32, i32) {
    %c0_i32 = arith.constant 0 : i32
    %c0_i32_0 = arith.constant 0 : i32
    return %arg0, %c0_i32 : i32, i32
  }
}

</mosaic_0001>

<llo_original>
// kernel: _lambda_.1
$region0: #{_lambda_.1}
  #allocation0 [shape = 'u32[]', space=smem, size = 0x4, offset = 0x4, fixed_abs, tag = 'smem constant byte address 0x4 - core index']
  #allocation1 [shape = 'u32[144,128]{1,0:T(1,128)}', space=vmem, size = 0x12000, scoped, tag = 'internal scratch']
  %s0 = inlined_call_operand.vmem [shape: f32[8,2,132], index: 0, kind: input, shape index: {}]
  %s1 = inlined_call_operand.vmem [shape: f32[8,16,128], index: 1, kind: input, shape index: {}]
  %s2 = inlined_call_operand.vmem [shape: f32[8,16,1], index: 2, kind: input, shape index: {}]
  %s3 = inlined_call_operand.hbm [shape: f32[8,128,32], index: 3, kind: input, shape index: {}]
  %s4 = inlined_call_operand.vmem [shape: f32[8,128], index: 4, kind: input, shape index: {}]
  %s5 = inlined_call_operand.vmem [shape: f32[16,10], index: 5, kind: input, shape index: {}]
  %s6 = inlined_call_operand.vmem [shape: f32[16,1], index: 6, kind: input, shape index: {}]
  %s7 = inlined_call_operand.hbm [shape: f32[8,32], index: 7, kind: output, shape index: {0}]
  %s8 = inlined_call_operand.hbm [shape: f32[8,128], index: 8, kind: output, shape index: {1}]
  %9 = xla_tuple %s7, %s8
  %s10 = sld [smem:[#allocation0]]
  $region50: #{_lambda_.1} parent=0
    _
  %s12 = ssub.s32 1, %s10
  %s13 = scalar_select 0, %s12, %s10
  $region1: #{_lambda_.1} parent=0
    #allocation2 [shape = 'u8[524288]{0}', space=vmem, size = 0x80000, scoped, tag = 'input window, operand 3, single buffered']
    #allocation3 [shape = 's32[1]{0}', space=sflag, size = 0x4, scoped, tag = 'scoped memory for _lambda_.1']
    #allocation4 [shape = 's32[1]{0}', space=sflag, size = 0x4, scoped, tag = 'scoped memory for _lambda_.1']
    #allocation5 [shape = 'u8[4096]{0}', space=vmem, size = 0x1000, scoped, tag = 'output window, operand 0, single buffered']
    #allocation6 [shape = 'u8[4096]{0}', space=vmem, size = 0x1000, scoped, tag = 'output window, operand 1, single buffered']
    #allocation7 [shape = 's32[1]{0}', space=sflag, size = 0x4, scoped, tag = 'scoped memory for _lambda_.1']
    %14 = vsyncpa [#allocation3], 0
    %15 = vsyncpa [#allocation4], 0
    %16 = vsyncpa [#allocation7], 0
    // Predicated region
    $region2: #{_lambda_.1} parent=1 // pred_check
      _
    $region3: #{_lambda_.1} parent=1 // pred_check_branch
      %18 = sbr.rel (0) target = $region5
    $region4: #{_lambda_.1} parent=1 // pred_region
      _
    $region5: #{_lambda_.1} parent=1 // pred_fallthru
      _
    // Predicated region
    $region6: #{_lambda_.1} parent=1 // pred_check
      _
    $region7: #{_lambda_.1} parent=1 // pred_check_branch
      %20 = sbr.rel (0) target = $region9
    $region8: #{_lambda_.1} parent=1 // pred_region
      _
    $region9: #{_lambda_.1} parent=1 // pred_fallthru
      _
    // Predicated region
    $region10: #{_lambda_.1} parent=1 // pred_check
      _
    $region11: #{_lambda_.1} parent=1 // pred_check_branch
      %22 = sbr.rel (0) target = $region13
    $region12: #{_lambda_.1} parent=1 // pred_region
      _
    $region13: #{_lambda_.1} parent=1 // pred_fallthru
      _
    // Predicated region
    $region14: #{_lambda_.1} parent=1 // pred_check
      _
    $region15: #{_lambda_.1} parent=1 // pred_check_branch
      %24 = sbr.rel (0) target = $region17
    $region16: #{_lambda_.1} parent=1 // pred_region
      %s26 = ssub.s32 16384, 16384
      %27 = vsyncadd [#allocation3], %s26
      %s28 = sshll.u32 [#allocation2], 4
      %s29 = int_to_ptr.vmem [resolvable:$true] %s28
      %34 = dma.hbm_to_vmem [thread:$0]  %s3, 16384, %s29, [#allocation3], 128, 128, 8
    $region17: #{_lambda_.1} parent=1 // pred_fallthru
      _
    // Predicated region
    $region18: #{_lambda_.1} parent=1 // pred_check
      _
    $region19: #{_lambda_.1} parent=1 // pred_check_branch
      %36 = sbr.rel (0) target = $region21
    $region20: #{_lambda_.1} parent=1 // pred_region
      _
    $region21: #{_lambda_.1} parent=1 // pred_fallthru
      _
    // Predicated region
    $region22: #{_lambda_.1} parent=1 // pred_check
      _
    $region23: #{_lambda_.1} parent=1 // pred_check_branch
      %38 = sbr.rel (0) target = $region25
    $region24: #{_lambda_.1} parent=1 // pred_region
      _
    $region25: #{_lambda_.1} parent=1 // pred_fallthru
      _
    // Predicated region
    $region26: #{_lambda_.1} parent=1 // pred_check
      _
    $region27: #{_lambda_.1} parent=1 // pred_check_branch
      %40 = sbr.rel (0) target = $region29
    $region28: #{_lambda_.1} parent=1 // pred_region
      _
    $region29: #{_lambda_.1} parent=1 // pred_fallthru
      _
    // Predicated region
    $region30: #{_lambda_.1} parent=1 // pred_check
      _
    $region31: #{_lambda_.1} parent=1 // pred_check_branch
      %42 = sbr.rel (0) target = $region33
    $region32: #{_lambda_.1} parent=1 // pred_region
      %43 = dma.done [#allocation3], 16384
    $region33: #{_lambda_.1} parent=1 // pred_fallthru
      _
    %v44 = vld [vmem:[%s0] sm:$0xf]
    %v45 = vld [vmem:[%s0 + $0x4] sm:$0xf]
    %v46 = vld [vmem:[%s0 + $0x8] sm:$0xf]
    %v47 = vld [vmem:[%s0 + $0xc] sm:$0xf]
    %v48 = vld [vmem:[%s0 + $0x10] sm:$0xf]
    %v49 = vld [vmem:[%s0 + $0x14] sm:$0xf]
    %v50 = vld [vmem:[%s0 + $0x18] sm:$0xf]
    %v51 = vld [vmem:[%s0 + $0x1c] sm:$0xf]
    %v60 = vcombine.low %v44, %v44
    %v62 = vunpack.c.l.s4 1983009808
    %v63 = vunpack.c.0.s8 %v62
    %v64 = vlaneseq
    %v65 = vshrl.u32 %v64, 7
    %v66 = vsub.s32 %v63, %v65
    %v67 = vrot.slane %v60, %v66
    %v69 = vunpack.c.l.s4 1983009808
    %v70 = vunpack.c.0.s8 %v69
    %v71 = vlaneseq
    %v72 = vshrl.u32 %v71, 7
    %v73 = vsub.s32 %v70, %v72
    %v74 = vrot.slane %v44, %v73
    %v75 = vcombine.high %v67, %v67
    %v76 = vcombine.low %v45, %v45
    %v78 = vunpack.c.l.s4 1983009808
    %v79 = vunpack.c.0.s8 %v78
    %v80 = vlaneseq
    %v81 = vshrl.u32 %v80, 7
    %v82 = vsub.s32 %v79, %v81
    %v83 = vrot.slane %v76, %v82
    %v85 = vunpack.c.l.s4 1983009808
    %v86 = vunpack.c.0.s8 %v85
    %v87 = vlaneseq
    %v88 = vshrl.u32 %v87, 7
    %v89 = vsub.s32 %v86, %v88
    %v90 = vrot.slane %v45, %v89
    %v91 = vcombine.high %v83, %v83
    %v92 = vcombine.low %v46, %v46
    %v94 = vunpack.c.l.s4 1983009808
    %v95 = vunpack.c.0.s8 %v94
    %v96 = vlaneseq
    %v97 = vshrl.u32 %v96, 7
    %v98 = vsub.s32 %v95, %v97
    %v99 = vrot.slane %v92, %v98
    %v101 = vunpack.c.l.s4 1983009808
    %v102 = vunpack.c.0.s8 %v101
    %v103 = vlaneseq
    %v104 = vshrl.u32 %v103, 7
    %v105 = vsub.s32 %v102, %v104
    %v106 = vrot.slane %v46, %v105
    %v107 = vcombine.high %v99, %v99
    %v108 = vcombine.low %v47, %v47
    %v110 = vunpack.c.l.s4 1983009808
    %v111 = vunpack.c.0.s8 %v110
    %v112 = vlaneseq
    %v113 = vshrl.u32 %v112, 7
    %v114 = vsub.s32 %v111, %v113
    %v115 = vrot.slane %v108, %v114
    %v117 = vunpack.c.l.s4 1983009808
    %v118 = vunpack.c.0.s8 %v117
    %v119 = vlaneseq
    %v120 = vshrl.u32 %v119, 7
    %v121 = vsub.s32 %v118, %v120
    %v122 = vrot.slane %v47, %v121
    %v123 = vcombine.high %v115, %v115
    %v124 = vcombine.low %v48, %v48
    %v126 = vunpack.c.l.s4 1983009808
    %v127 = vunpack.c.0.s8 %v126
    %v128 = vlaneseq
    %v129 = vshrl.u32 %v128, 7
    %v130 = vsub.s32 %v127, %v129
    %v131 = vrot.slane %v124, %v130
    %v133 = vunpack.c.l.s4 1983009808
    %v134 = vunpack.c.0.s8 %v133
    %v135 = vlaneseq
    %v136 = vshrl.u32 %v135, 7
    %v137 = vsub.s32 %v134, %v136
    %v138 = vrot.slane %v48, %v137
    %v139 = vcombine.high %v131, %v131
    %v140 = vcombine.low %v49, %v49
    %v142 = vunpack.c.l.s4 1983009808
    %v143 = vunpack.c.0.s8 %v142
    %v144 = vlaneseq
    %v145 = vshrl.u32 %v144, 7
    %v146 = vsub.s32 %v143, %v145
    %v147 = vrot.slane %v140, %v146
    %v149 = vunpack.c.l.s4 1983009808
    %v150 = vunpack.c.0.s8 %v149
    %v151 = vlaneseq
    %v152 = vshrl.u32 %v151, 7
    %v153 = vsub.s32 %v150, %v152
    %v154 = vrot.slane %v49, %v153
    %v155 = vcombine.high %v147, %v147
    %v156 = vcombine.low %v50, %v50
    %v158 = vunpack.c.l.s4 1983009808
    %v159 = vunpack.c.0.s8 %v158
    %v160 = vlaneseq
    %v161 = vshrl.u32 %v160, 7
    %v162 = vsub.s32 %v159, %v161
    %v163 = vrot.slane %v156, %v162
    %v165 = vunpack.c.l.s4 1983009808
    %v166 = vunpack.c.0.s8 %v165
    %v167 = vlaneseq
    %v168 = vshrl.u32 %v167, 7
    %v169 = vsub.s32 %v166, %v168
    %v170 = vrot.slane %v50, %v169
    %v171 = vcombine.high %v163, %v163
    %v172 = vcombine.low %v51, %v51
    %v174 = vunpack.c.l.s4 1983009808
    %v175 = vunpack.c.0.s8 %v174
    %v176 = vlaneseq
    %v177 = vshrl.u32 %v176, 7
    %v178 = vsub.s32 %v175, %v177
    %v179 = vrot.slane %v172, %v178
    %v181 = vunpack.c.l.s4 1983009808
    %v182 = vunpack.c.0.s8 %v181
    %v183 = vlaneseq
    %v184 = vshrl.u32 %v183, 7
    %v185 = vsub.s32 %v182, %v184
    %v186 = vrot.slane %v51, %v185
    %v187 = vcombine.high %v179, %v179
    %188 = vrot.lane.b32.xlu0 %v67, 127
    %v189 = vpop.permute.xlu0 %188
    %190 = vrot.lane.b32.xlu0 %v75, 127
    %v191 = vpop.permute.xlu0 %190
    %192 = vrot.lane.b32.xlu0 %v83, 127
    %v193 = vpop.permute.xlu0 %192
    %194 = vrot.lane.b32.xlu0 %v91, 127
    %v195 = vpop.permute.xlu0 %194
    %196 = vrot.lane.b32.xlu0 %v99, 127
    %v197 = vpop.permute.xlu0 %196
    %198 = vrot.lane.b32.xlu0 %v107, 127
    %v199 = vpop.permute.xlu0 %198
    %200 = vrot.lane.b32.xlu0 %v115, 127
    %v201 = vpop.permute.xlu0 %200
    %202 = vrot.lane.b32.xlu0 %v123, 127
    %v203 = vpop.permute.xlu0 %202
    %204 = vrot.lane.b32.xlu0 %v131, 127
    %v205 = vpop.permute.xlu0 %204
    %206 = vrot.lane.b32.xlu0 %v139, 127
    %v207 = vpop.permute.xlu0 %206
    %208 = vrot.lane.b32.xlu0 %v147, 127
    %v209 = vpop.permute.xlu0 %208
    %210 = vrot.lane.b32.xlu0 %v155, 127
    %v211 = vpop.permute.xlu0 %210
    %212 = vrot.lane.b32.xlu0 %v163, 127
    %v213 = vpop.permute.xlu0 %212
    %214 = vrot.lane.b32.xlu0 %v171, 127
    %v215 = vpop.permute.xlu0 %214
    %216 = vrot.lane.b32.xlu0 %v179, 127
    %v217 = vpop.permute.xlu0 %216
    %218 = vrot.lane.b32.xlu0 %v187, 127
    %v219 = vpop.permute.xlu0 %218
    %vm220 = vcmask 1039360
    %v221 = vsel %vm220, %v189, %v191
    %v222 = vsel %vm220, %v193, %v195
    %v223 = vsel %vm220, %v197, %v199
    %v224 = vsel %vm220, %v201, %v203
    %v225 = vsel %vm220, %v205, %v207
    %v226 = vsel %vm220, %v209, %v211
    %v227 = vsel %vm220, %v213, %v215
    %v228 = vsel %vm220, %v217, %v219
    %v237 = vcombine.low %v74, %v74
    %v238 = vcombine.low %v90, %v90
    %v239 = vcombine.low %v106, %v106
    %v240 = vcombine.low %v122, %v122
    %v241 = vcombine.low %v138, %v138
    %v242 = vcombine.low %v154, %v154
    %v243 = vcombine.low %v170, %v170
    %v244 = vcombine.low %v186, %v186
    %245 = vrot.lane.b32.xlu0 %v237, 126
    %v246 = vpop.permute.xlu0 %245
    %247 = vrot.lane.b32.xlu0 %v74, 126
    %v248 = vpop.permute.xlu0 %247
    %249 = vrot.lane.b32.xlu0 %v238, 126
    %v250 = vpop.permute.xlu0 %249
    %251 = vrot.lane.b32.xlu0 %v90, 126
    %v252 = vpop.permute.xlu0 %251
    %253 = vrot.lane.b32.xlu0 %v239, 126
    %v254 = vpop.permute.xlu0 %253
    %255 = vrot.lane.b32.xlu0 %v106, 126
    %v256 = vpop.permute.xlu0 %255
    %257 = vrot.lane.b32.xlu0 %v240, 126
    %v258 = vpop.permute.xlu0 %257
    %259 = vrot.lane.b32.xlu0 %v122, 126
    %v260 = vpop.permute.xlu0 %259
    %261 = vrot.lane.b32.xlu0 %v241, 126
    %v262 = vpop.permute.xlu0 %261
    %263 = vrot.lane.b32.xlu0 %v138, 126
    %v264 = vpop.permute.xlu0 %263
    %265 = vrot.lane.b32.xlu0 %v242, 126
    %v266 = vpop.permute.xlu0 %265
    %267 = vrot.lane.b32.xlu0 %v154, 126
    %v268 = vpop.permute.xlu0 %267
    %269 = vrot.lane.b32.xlu0 %v243, 126
    %v270 = vpop.permute.xlu0 %269
    %271 = vrot.lane.b32.xlu0 %v170, 126
    %v272 = vpop.permute.xlu0 %271
    %273 = vrot.lane.b32.xlu0 %v244, 126
    %v274 = vpop.permute.xlu0 %273
    %275 = vrot.lane.b32.xlu0 %v186, 126
    %v276 = vpop.permute.xlu0 %275
    %vm277 = vcmask 1031168
    %v278 = vsel %vm277, %v246, %v248
    %v279 = vsel %vm277, %v250, %v252
    %v280 = vsel %vm277, %v254, %v256
    %v281 = vsel %vm277, %v258, %v260
    %v282 = vsel %vm277, %v262, %v264
    %v283 = vsel %vm277, %v266, %v268
    %v284 = vsel %vm277, %v270, %v272
    %v285 = vsel %vm277, %v274, %v276
    %v294 = vcombine.low %v67, %v67
    %v295 = vcombine.low %v83, %v83
    %v296 = vcombine.low %v99, %v99
    %v297 = vcombine.low %v115, %v115
    %v298 = vcombine.low %v131, %v131
    %v299 = vcombine.low %v147, %v147
    %v300 = vcombine.low %v163, %v163
    %v301 = vcombine.low %v179, %v179
    %302 = vrot.lane.b32.xlu0 %v294, 125
    %v303 = vpop.permute.xlu0 %302
    %304 = vrot.lane.b32.xlu0 %v67, 125
    %v305 = vpop.permute.xlu0 %304
    %306 = vrot.lane.b32.xlu0 %v295, 125
    %v307 = vpop.permute.xlu0 %306
    %308 = vrot.lane.b32.xlu0 %v83, 125
    %v309 = vpop.permute.xlu0 %308
    %310 = vrot.lane.b32.xlu0 %v296, 125
    %v311 = vpop.permute.xlu0 %310
    %312 = vrot.lane.b32.xlu0 %v99, 125
    %v313 = vpop.permute.xlu0 %312
    %314 = vrot.lane.b32.xlu0 %v297, 125
    %v315 = vpop.permute.xlu0 %314
    %316 = vrot.lane.b32.xlu0 %v115, 125
    %v317 = vpop.permute.xlu0 %316
    %318 = vrot.lane.b32.xlu0 %v298, 125
    %v319 = vpop.permute.xlu0 %318
    %320 = vrot.lane.b32.xlu0 %v131, 125
    %v321 = vpop.permute.xlu0 %320
    %322 = vrot.lane.b32.xlu0 %v299, 125
    %v323 = vpop.permute.xlu0 %322
    %324 = vrot.lane.b32.xlu0 %v147, 125
    %v325 = vpop.permute.xlu0 %324
    %326 = vrot.lane.b32.xlu0 %v300, 125
    %v327 = vpop.permute.xlu0 %326
    %328 = vrot.lane.b32.xlu0 %v163, 125
    %v329 = vpop.permute.xlu0 %328
    %330 = vrot.lane.b32.xlu0 %v301, 125
    %v331 = vpop.permute.xlu0 %330
    %332 = vrot.lane.b32.xlu0 %v179, 125
    %v333 = vpop.permute.xlu0 %332
    %vm334 = vcmask 1022976
    %v335 = vsel %vm334, %v303, %v305
    %v336 = vsel %vm334, %v307, %v309
    %v337 = vsel %vm334, %v311, %v313
    %v338 = vsel %vm334, %v315, %v317
    %v339 = vsel %vm334, %v319, %v321
    %v340 = vsel %vm334, %v323, %v325
    %v341 = vsel %vm334, %v327, %v329
    %v342 = vsel %vm334, %v331, %v333
    %v351 = vcombine.high %v74, %v74
    %v352 = vcombine.high %v90, %v90
    %v353 = vcombine.high %v106, %v106
    %v354 = vcombine.high %v122, %v122
    %v355 = vcombine.high %v138, %v138
    %v356 = vcombine.high %v154, %v154
    %v357 = vcombine.high %v170, %v170
    %v358 = vcombine.high %v186, %v186
    %359 = vrot.lane.b32.xlu0 %v74, 124
    %v360 = vpop.permute.xlu0 %359
    %361 = vrot.lane.b32.xlu0 %v351, 124
    %v362 = vpop.permute.xlu0 %361
    %363 = vrot.lane.b32.xlu0 %v90, 124
    %v364 = vpop.permute.xlu0 %363
    %365 = vrot.lane.b32.xlu0 %v352, 124
    %v366 = vpop.permute.xlu0 %365
    %367 = vrot.lane.b32.xlu0 %v106, 124
    %v368 = vpop.permute.xlu0 %367
    %369 = vrot.lane.b32.xlu0 %v353, 124
    %v370 = vpop.permute.xlu0 %369
    %371 = vrot.lane.b32.xlu0 %v122, 124
    %v372 = vpop.permute.xlu0 %371
    %373 = vrot.lane.b32.xlu0 %v354, 124
    %v374 = vpop.permute.xlu0 %373
    %375 = vrot.lane.b32.xlu0 %v138, 124
    %v376 = vpop.permute.xlu0 %375
    %377 = vrot.lane.b32.xlu0 %v355, 124
    %v378 = vpop.permute.xlu0 %377
    %379 = vrot.lane.b32.xlu0 %v154, 124
    %v380 = vpop.permute.xlu0 %379
    %381 = vrot.lane.b32.xlu0 %v356, 124
    %v382 = vpop.permute.xlu0 %381
    %383 = vrot.lane.b32.xlu0 %v170, 124
    %v384 = vpop.permute.xlu0 %383
    %385 = vrot.lane.b32.xlu0 %v357, 124
    %v386 = vpop.permute.xlu0 %385
    %387 = vrot.lane.b32.xlu0 %v186, 124
    %v388 = vpop.permute.xlu0 %387
    %389 = vrot.lane.b32.xlu0 %v358, 124
    %v390 = vpop.permute.xlu0 %389
    %vm391 = vcmask 1014784
    %v392 = vsel %vm391, %v360, %v362
    %v393 = vsel %vm391, %v364, %v366
    %v394 = vsel %vm391, %v368, %v370
    %v395 = vsel %vm391, %v372, %v374
    %v396 = vsel %vm391, %v376, %v378
    %v397 = vsel %vm391, %v380, %v382
    %v398 = vsel %vm391, %v384, %v386
    %v399 = vsel %vm391, %v388, %v390
    %vm400 = vcmask 1041408
    %v401 = vsel %vm400, %v44, %v221
    %v402 = vsel %vm400, %v45, %v222
    %v403 = vsel %vm400, %v46, %v223
    %v404 = vsel %vm400, %v47, %v224
    %v405 = vsel %vm400, %v48, %v225
    %v406 = vsel %vm400, %v49, %v226
    %v407 = vsel %vm400, %v50, %v227
    %v408 = vsel %vm400, %v51, %v228
    %vm409 = vcmask 1043456
    %v410 = vsel %vm409, %v401, %v278
    %v411 = vsel %vm409, %v402, %v279
    %v412 = vsel %vm409, %v403, %v280
    %v413 = vsel %vm409, %v404, %v281
    %v414 = vsel %vm409, %v405, %v282
    %v415 = vsel %vm409, %v406, %v283
    %v416 = vsel %vm409, %v407, %v284
    %v417 = vsel %vm409, %v408, %v285
    %vm418 = vcmask 1045504
    %v419 = vsel %vm418, %v410, %v335
    %v420 = vsel %vm418, %v411, %v336
    %v421 = vsel %vm418, %v412, %v337
    %v422 = vsel %vm418, %v413, %v338
    %v423 = vsel %vm418, %v414, %v339
    %v424 = vsel %vm418, %v415, %v340
    %v425 = vsel %vm418, %v416, %v341
    %v426 = vsel %vm418, %v417, %v342
    %v427 = vld [vmem:[%s5] sm:$0xff]
    %v428 = vld [vmem:[%s5 + $0x8] sm:$0xff]
    %v429 = vld [vmem:[%s1] sm:$0xff]
    %v430 = vld [vmem:[%s1 + $0x8] sm:$0xff]
    %v431 = vld [vmem:[%s1 + $0x10] sm:$0xff]
    %v432 = vld [vmem:[%s1 + $0x18] sm:$0xff]
    %v433 = vld [vmem:[%s1 + $0x20] sm:$0xff]
    %v434 = vld [vmem:[%s1 + $0x28] sm:$0xff]
    %v435 = vld [vmem:[%s1 + $0x30] sm:$0xff]
    %v436 = vld [vmem:[%s1 + $0x38] sm:$0xff]
    %v437 = vld [vmem:[%s1 + $0x40] sm:$0xff]
    %v438 = vld [vmem:[%s1 + $0x48] sm:$0xff]
    %v439 = vld [vmem:[%s1 + $0x50] sm:$0xff]
    %v440 = vld [vmem:[%s1 + $0x58] sm:$0xff]
    %v441 = vld [vmem:[%s1 + $0x60] sm:$0xff]
    %v442 = vld [vmem:[%s1 + $0x68] sm:$0xff]
    %v443 = vld [vmem:[%s1 + $0x70] sm:$0xff]
    %v444 = vld [vmem:[%s1 + $0x78] sm:$0xff]
    %vm445 = vcmask 80896
    %v447 = vsel %vm445, %v427, 0
    %v450 = vsel %vm445, %v428, 0
    %v452 = vsel %vm400, %v392, 0
    %454 = vmatprep.subr.mxu0 0.0
    %455 = vmatpush1.msra.mxu0 0.0
    %456 = vmatprep.subr.mxu0 0.0
    %457 = vmatpush1.msra.mxu0 0.0
    %458 = vmatprep.subr.mxu0 0.0
    %459 = vmatpush1.msra.mxu0 0.0
    %460 = vmatprep.subr.mxu0 0.0
    %461 = vmatpush1.msra.mxu0 0.0
    %462 = vmatprep.subr.mxu0 0.0
    %463 = vmatpush1.msra.mxu0 0.0
    %464 = vmatprep.subr.mxu0 0.0
    %465 = vmatpush1.msra.mxu0 0.0
    %466 = vmatprep.subr.mxu0 0.0
    %467 = vmatpush1.msra.mxu0 0.0
    %468 = vmatprep.subr.mxu0 0.0
    %469 = vmatpush1.msra.mxu0 0.0
    %470 = vmatprep.subr.mxu0 0.0
    %471 = vmatpush1.msra.mxu0 0.0
    %472 = vmatprep.subr.mxu0 0.0
    %473 = vmatpush1.msra.mxu0 0.0
    %474 = vmatprep.subr.mxu0 0.0
    %475 = vmatpush1.msra.mxu0 0.0
    %476 = vmatprep.subr.mxu0 0.0
    %477 = vmatpush1.msra.mxu0 0.0
    %478 = vmatprep.subr.mxu0 0.0
    %479 = vmatpush1.msra.mxu0 0.0
    %480 = vmatprep.subr.mxu0 0.0
    %481 = vmatpush1.msra.mxu0 0.0
    %482 = vmatprep.subr.mxu0 0.0
    %483 = vmatpush1.msra.mxu0 %v452
    %484 = vmatprep.subr.mxu0 0.0
    %485 = vmatpush1.msra.mxu0 %v419
    %486 = vmatprep.subr.mxu0 0.0
    %487 = vmatpush2.msra.mxu0 0.0
    %488 = vmatprep.subr.mxu0 0.0
    %489 = vmatpush2.msra.mxu0 0.0
    %490 = vmatprep.subr.mxu0 0.0
    %491 = vmatpush2.msra.mxu0 0.0
    %492 = vmatprep.subr.mxu0 0.0
    %493 = vmatpush2.msra.mxu0 0.0
    %494 = vmatprep.subr.mxu0 0.0
    %495 = vmatpush2.msra.mxu0 0.0
    %496 = vmatprep.subr.mxu0 0.0
    %497 = vmatpush2.msra.mxu0 0.0
    %498 = vmatprep.subr.mxu0 0.0
    %499 = vmatpush2.msra.mxu0 0.0
    %500 = vmatprep.subr.mxu0 0.0
    %501 = vmatpush2.msra.mxu0 0.0
    %502 = vmatprep.subr.mxu0 0.0
    %503 = vmatpush2.msra.mxu0 0.0
    %504 = vmatprep.subr.mxu0 0.0
    %505 = vmatpush2.msra.mxu0 0.0
    %506 = vmatprep.subr.mxu0 0.0
    %507 = vmatpush2.msra.mxu0 0.0
    %508 = vmatprep.subr.mxu0 0.0
    %509 = vmatpush2.msra.mxu0 0.0
    %510 = vmatprep.subr.mxu0 0.0
    %511 = vmatpush2.msra.mxu0 0.0
    %512 = vmatprep.subr.mxu0 0.0
    %513 = vmatpush2.msra.mxu0 0.0
    %514 = vmatprep.subr.mxu0 0.0
    %515 = vmatpush2.msra.mxu0 0.0
    %516 = vmatprep.subr.mxu0 0.0
    %517 = vmatpush2.msra.mxu0 0.0
    %518 = vmatprep.mubr.f32.mxu0 0.0
    %519 = vmatmul.mubr.f32.gmra.mxu0 %v447
    %v520 = vpop.f32.mrf.mxu0
    %v521 = vadd.f32 %v429, %v520
    %v522 = vpop.f32.mrf.mxu0
    %523 = vmatprep.mubr.f32.mxu0 0.0
    %524 = vmatmul.mubr.f32.gmra.mxu0 %v450
    %v525 = vpop.f32.mrf.mxu0
    %v526 = vadd.f32 %v430, %v525
    %v527 = vpop.f32.mrf.mxu0
    %528 = vdwg.mxu0
    %v529 = vsel %vm400, %v393, 0
    %531 = vmatprep.subr.mxu0 0.0
    %532 = vmatpush1.msra.mxu0 0.0
    %533 = vmatprep.subr.mxu0 0.0
    %534 = vmatpush1.msra.mxu0 0.0
    %535 = vmatprep.subr.mxu0 0.0
    %536 = vmatpush1.msra.mxu0 0.0
    %537 = vmatprep.subr.mxu0 0.0
    %538 = vmatpush1.msra.mxu0 0.0
    %539 = vmatprep.subr.mxu0 0.0
    %540 = vmatpush1.msra.mxu0 0.0
    %541 = vmatprep.subr.mxu0 0.0
    %542 = vmatpush1.msra.mxu0 0.0
    %543 = vmatprep.subr.mxu0 0.0
    %544 = vmatpush1.msra.mxu0 0.0
    %545 = vmatprep.subr.mxu0 0.0
    %546 = vmatpush1.msra.mxu0 0.0
    %547 = vmatprep.subr.mxu0 0.0
    %548 = vmatpush1.msra.mxu0 0.0
    %549 = vmatprep.subr.mxu0 0.0
    %550 = vmatpush1.msra.mxu0 0.0
    %551 = vmatprep.subr.mxu0 0.0
    %552 = vmatpush1.msra.mxu0 0.0
    %553 = vmatprep.subr.mxu0 0.0
    %554 = vmatpush1.msra.mxu0 0.0
    %555 = vmatprep.subr.mxu0 0.0
    %556 = vmatpush1.msra.mxu0 0.0
    %557 = vmatprep.subr.mxu0 0.0
    %558 = vmatpush1.msra.mxu0 0.0
    %559 = vmatprep.subr.mxu0 0.0
    %560 = vmatpush1.msra.mxu0 %v529
    %561 = vmatprep.subr.mxu0 0.0
    %562 = vmatpush1.msra.mxu0 %v420
    %563 = vmatprep.subr.mxu0 0.0
    %564 = vmatpush2.msra.mxu0 0.0
    %565 = vmatprep.subr.mxu0 0.0
    %566 = vmatpush2.msra.mxu0 0.0
    %567 = vmatprep.subr.mxu0 0.0
    %568 = vmatpush2.msra.mxu0 0.0
    %569 = vmatprep.subr.mxu0 0.0
    %570 = vmatpush2.msra.mxu0 0.0
    %571 = vmatprep.subr.mxu0 0.0
    %572 = vmatpush2.msra.mxu0 0.0
    %573 = vmatprep.subr.mxu0 0.0
    %574 = vmatpush2.msra.mxu0 0.0
    %575 = vmatprep.subr.mxu0 0.0
    %576 = vmatpush2.msra.mxu0 0.0
    %577 = vmatprep.subr.mxu0 0.0
    %578 = vmatpush2.msra.mxu0 0.0
    %579 = vmatprep.subr.mxu0 0.0
    %580 = vmatpush2.msra.mxu0 0.0
    %581 = vmatprep.subr.mxu0 0.0
    %582 = vmatpush2.msra.mxu0 0.0
    %583 = vmatprep.subr.mxu0 0.0
    %584 = vmatpush2.msra.mxu0 0.0
    %585 = vmatprep.subr.mxu0 0.0
    %586 = vmatpush2.msra.mxu0 0.0
    %587 = vmatprep.subr.mxu0 0.0
    %588 = vmatpush2.msra.mxu0 0.0
    %589 = vmatprep.subr.mxu0 0.0
    %590 = vmatpush2.msra.mxu0 0.0
    %591 = vmatprep.subr.mxu0 0.0
    %592 = vmatpush2.msra.mxu0 0.0
    %593 = vmatprep.subr.mxu0 0.0
    %594 = vmatpush2.msra.mxu0 0.0
    %595 = vmatprep.mubr.f32.mxu0 0.0
    %596 = vmatmul.mubr.f32.gmra.mxu0 %v447
    %v597 = vpop.f32.mrf.mxu0
    %v598 = vadd.f32 %v431, %v597
    %v599 = vpop.f32.mrf.mxu0
    %600 = vmatprep.mubr.f32.mxu0 0.0
    %601 = vmatmul.mubr.f32.gmra.mxu0 %v450
    %v602 = vpop.f32.mrf.mxu0
    %v603 = vadd.f32 %v432, %v602
    %v604 = vpop.f32.mrf.mxu0
    %605 = vdwg.mxu0
    %v606 = vsel %vm400, %v394, 0
    %608 = vmatprep.subr.mxu0 0.0
    %609 = vmatpush1.msra.mxu0 0.0
    %610 = vmatprep.subr.mxu0 0.0
    %611 = vmatpush1.msra.mxu0 0.0
    %612 = vmatprep.subr.mxu0 0.0
    %613 = vmatpush1.msra.mxu0 0.0
    %614 = vmatprep.subr.mxu0 0.0
    %615 = vmatpush1.msra.mxu0 0.0
    %616 = vmatprep.subr.mxu0 0.0
    %617 = vmatpush1.msra.mxu0 0.0
    %618 = vmatprep.subr.mxu0 0.0
    %619 = vmatpush1.msra.mxu0 0.0
    %620 = vmatprep.subr.mxu0 0.0
    %621 = vmatpush1.msra.mxu0 0.0
    %622 = vmatprep.subr.mxu0 0.0
    %623 = vmatpush1.msra.mxu0 0.0
    %624 = vmatprep.subr.mxu0 0.0
    %625 = vmatpush1.msra.mxu0 0.0
    %626 = vmatprep.subr.mxu0 0.0
    %627 = vmatpush1.msra.mxu0 0.0
    %628 = vmatprep.subr.mxu0 0.0
    %629 = vmatpush1.msra.mxu0 0.0
    %630 = vmatprep.subr.mxu0 0.0
    %631 = vmatpush1.msra.mxu0 0.0
    %632 = vmatprep.subr.mxu0 0.0
    %633 = vmatpush1.msra.mxu0 0.0
    %634 = vmatprep.subr.mxu0 0.0
    %635 = vmatpush1.msra.mxu0 0.0
    %636 = vmatprep.subr.mxu0 0.0
    %637 = vmatpush1.msra.mxu0 %v606
    %638 = vmatprep.subr.mxu0 0.0
    %639 = vmatpush1.msra.mxu0 %v421
    %640 = vmatprep.subr.mxu0 0.0
    %641 = vmatpush2.msra.mxu0 0.0
    %642 = vmatprep.subr.mxu0 0.0
    %643 = vmatpush2.msra.mxu0 0.0
    %644 = vmatprep.subr.mxu0 0.0
    %645 = vmatpush2.msra.mxu0 0.0
    %646 = vmatprep.subr.mxu0 0.0
    %647 = vmatpush2.msra.mxu0 0.0
    %648 = vmatprep.subr.mxu0 0.0
    %649 = vmatpush2.msra.mxu0 0.0
    %650 = vmatprep.subr.mxu0 0.0
    %651 = vmatpush2.msra.mxu0 0.0
    %652 = vmatprep.subr.mxu0 0.0
    %653 = vmatpush2.msra.mxu0 0.0
    %654 = vmatprep.subr.mxu0 0.0
    %655 = vmatpush2.msra.mxu0 0.0
    %656 = vmatprep.subr.mxu0 0.0
    %657 = vmatpush2.msra.mxu0 0.0
    %658 = vmatprep.subr.mxu0 0.0
    %659 = vmatpush2.msra.mxu0 0.0
    %660 = vmatprep.subr.mxu0 0.0
    %661 = vmatpush2.msra.mxu0 0.0
    %662 = vmatprep.subr.mxu0 0.0
    %663 = vmatpush2.msra.mxu0 0.0
    %664 = vmatprep.subr.mxu0 0.0
    %665 = vmatpush2.msra.mxu0 0.0
    %666 = vmatprep.subr.mxu0 0.0
    %667 = vmatpush2.msra.mxu0 0.0
    %668 = vmatprep.subr.mxu0 0.0
    %669 = vmatpush2.msra.mxu0 0.0
    %670 = vmatprep.subr.mxu0 0.0
    %671 = vmatpush2.msra.mxu0 0.0
    %672 = vmatprep.mubr.f32.mxu0 0.0
    %673 = vmatmul.mubr.f32.gmra.mxu0 %v447
    %v674 = vpop.f32.mrf.mxu0
    %v675 = vadd.f32 %v433, %v674
    %v676 = vpop.f32.mrf.mxu0
    %677 = vmatprep.mubr.f32.mxu0 0.0
    %678 = vmatmul.mubr.f32.gmra.mxu0 %v450
    %v679 = vpop.f32.mrf.mxu0
    %v680 = vadd.f32 %v434, %v679
    %v681 = vpop.f32.mrf.mxu0
    %682 = vdwg.mxu0
    %v683 = vsel %vm400, %v395, 0
    %685 = vmatprep.subr.mxu0 0.0
    %686 = vmatpush1.msra.mxu0 0.0
    %687 = vmatprep.subr.mxu0 0.0
    %688 = vmatpush1.msra.mxu0 0.0
    %689 = vmatprep.subr.mxu0 0.0
    %690 = vmatpush1.msra.mxu0 0.0
    %691 = vmatprep.subr.mxu0 0.0
    %692 = vmatpush1.msra.mxu0 0.0
    %693 = vmatprep.subr.mxu0 0.0
    %694 = vmatpush1.msra.mxu0 0.0
    %695 = vmatprep.subr.mxu0 0.0
    %696 = vmatpush1.msra.mxu0 0.0
    %697 = vmatprep.subr.mxu0 0.0
    %698 = vmatpush1.msra.mxu0 0.0
    %699 = vmatprep.subr.mxu0 0.0
    %700 = vmatpush1.msra.mxu0 0.0
    %701 = vmatprep.subr.mxu0 0.0
    %702 = vmatpush1.msra.mxu0 0.0
    %703 = vmatprep.subr.mxu0 0.0
    %704 = vmatpush1.msra.mxu0 0.0
    %705 = vmatprep.subr.mxu0 0.0
    %706 = vmatpush1.msra.mxu0 0.0
    %707 = vmatprep.subr.mxu0 0.0
    %708 = vmatpush1.msra.mxu0 0.0
    %709 = vmatprep.subr.mxu0 0.0
    %710 = vmatpush1.msra.mxu0 0.0
    %711 = vmatprep.subr.mxu0 0.0
    %712 = vmatpush1.msra.mxu0 0.0
    %713 = vmatprep.subr.mxu0 0.0
    %714 = vmatpush1.msra.mxu0 %v683
    %715 = vmatprep.subr.mxu0 0.0
    %716 = vmatpush1.msra.mxu0 %v422
    %717 = vmatprep.subr.mxu0 0.0
    %718 = vmatpush2.msra.mxu0 0.0
    %719 = vmatprep.subr.mxu0 0.0
    %720 = vmatpush2.msra.mxu0 0.0
    %721 = vmatprep.subr.mxu0 0.0
    %722 = vmatpush2.msra.mxu0 0.0
    %723 = vmatprep.subr.mxu0 0.0
    %724 = vmatpush2.msra.mxu0 0.0
    %725 = vmatprep.subr.mxu0 0.0
    %726 = vmatpush2.msra.mxu0 0.0
    %727 = vmatprep.subr.mxu0 0.0
    %728 = vmatpush2.msra.mxu0 0.0
    %729 = vmatprep.subr.mxu0 0.0
    %730 = vmatpush2.msra.mxu0 0.0
    %731 = vmatprep.subr.mxu0 0.0
    %732 = vmatpush2.msra.mxu0 0.0
    %733 = vmatprep.subr.mxu0 0.0
    %734 = vmatpush2.msra.mxu0 0.0
    %735 = vmatprep.subr.mxu0 0.0
    %736 = vmatpush2.msra.mxu0 0.0
    %737 = vmatprep.subr.mxu0 0.0
    %738 = vmatpush2.msra.mxu0 0.0
    %739 = vmatprep.subr.mxu0 0.0
    %740 = vmatpush2.msra.mxu0 0.0
    %741 = vmatprep.subr.mxu0 0.0
    %742 = vmatpush2.msra.mxu0 0.0
    %743 = vmatprep.subr.mxu0 0.0
    %744 = vmatpush2.msra.mxu0 0.0
    %745 = vmatprep.subr.mxu0 0.0
    %746 = vmatpush2.msra.mxu0 0.0
    %747 = vmatprep.subr.mxu0 0.0
    %748 = vmatpush2.msra.mxu0 0.0
    %749 = vmatprep.mubr.f32.mxu0 0.0
    %750 = vmatmul.mubr.f32.gmra.mxu0 %v447
    %v751 = vpop.f32.mrf.mxu0
    %v752 = vadd.f32 %v435, %v751
    %v753 = vpop.f32.mrf.mxu0
    %754 = vmatprep.mubr.f32.mxu0 0.0
    %755 = vmatmul.mubr.f32.gmra.mxu0 %v450
    %v756 = vpop.f32.mrf.mxu0
    %v757 = vadd.f32 %v436, %v756
    %v758 = vpop.f32.mrf.mxu0
    %759 = vdwg.mxu0
    %v760 = vsel %vm400, %v396, 0
    %762 = vmatprep.subr.mxu0 0.0
    %763 = vmatpush1.msra.mxu0 0.0
    %764 = vmatprep.subr.mxu0 0.0
    %765 = vmatpush1.msra.mxu0 0.0
    %766 = vmatprep.subr.mxu0 0.0
    %767 = vmatpush1.msra.mxu0 0.0
    %768 = vmatprep.subr.mxu0 0.0
    %769 = vmatpush1.msra.mxu0 0.0
    %770 = vmatprep.subr.mxu0 0.0
    %771 = vmatpush1.msra.mxu0 0.0
    %772 = vmatprep.subr.mxu0 0.0
    %773 = vmatpush1.msra.mxu0 0.0
    %774 = vmatprep.subr.mxu0 0.0
    %775 = vmatpush1.msra.mxu0 0.0
    %776 = vmatprep.subr.mxu0 0.0
    %777 = vmatpush1.msra.mxu0 0.0
    %778 = vmatprep.subr.mxu0 0.0
    %779 = vmatpush1.msra.mxu0 0.0
    %780 = vmatprep.subr.mxu0 0.0
    %781 = vmatpush1.msra.mxu0 0.0
    %782 = vmatprep.subr.mxu0 0.0
    %783 = vmatpush1.msra.mxu0 0.0
    %784 = vmatprep.subr.mxu0 0.0
    %785 = vmatpush1.msra.mxu0 0.0
    %786 = vmatprep.subr.mxu0 0.0
    %787 = vmatpush1.msra.mxu0 0.0
    %788 = vmatprep.subr.mxu0 0.0
    %789 = vmatpush1.msra.mxu0 0.0
    %790 = vmatprep.subr.mxu0 0.0
    %791 = vmatpush1.msra.mxu0 %v760
    %792 = vmatprep.subr.mxu0 0.0
    %793 = vmatpush1.msra.mxu0 %v423
    %794 = vmatprep.subr.mxu0 0.0
    %795 = vmatpush2.msra.mxu0 0.0
    %796 = vmatprep.subr.mxu0 0.0
    %797 = vmatpush2.msra.mxu0 0.0
    %798 = vmatprep.subr.mxu0 0.0
    %799 = vmatpush2.msra.mxu0 0.0
    %800 = vmatprep.subr.mxu0 0.0
    %801 = vmatpush2.msra.mxu0 0.0
    %802 = vmatprep.subr.mxu0 0.0
    %803 = vmatpush2.msra.mxu0 0.0
    %804 = vmatprep.subr.mxu0 0.0
    %805 = vmatpush2.msra.mxu0 0.0
    %806 = vmatprep.subr.mxu0 0.0
    %807 = vmatpush2.msra.mxu0 0.0
    %808 = vmatprep.subr.mxu0 0.0
    %809 = vmatpush2.msra.mxu0 0.0
    %810 = vmatprep.subr.mxu0 0.0
    %811 = vmatpush2.msra.mxu0 0.0
    %812 = vmatprep.subr.mxu0 0.0
    %813 = vmatpush2.msra.mxu0 0.0
    %814 = vmatprep.subr.mxu0 0.0
    %815 = vmatpush2.msra.mxu0 0.0
    %816 = vmatprep.subr.mxu0 0.0
    %817 = vmatpush2.msra.mxu0 0.0
    %818 = vmatprep.subr.mxu0 0.0
    %819 = vmatpush2.msra.mxu0 0.0
    %820 = vmatprep.subr.mxu0 0.0
    %821 = vmatpush2.msra.mxu0 0.0
    %822 = vmatprep.subr.mxu0 0.0
    %823 = vmatpush2.msra.mxu0 0.0
    %824 = vmatprep.subr.mxu0 0.0
    %825 = vmatpush2.msra.mxu0 0.0
    %826 = vmatprep.mubr.f32.mxu0 0.0
    %827 = vmatmul.mubr.f32.gmra.mxu0 %v447
    %v828 = vpop.f32.mrf.mxu0
    %v829 = vadd.f32 %v437, %v828
    %v830 = vpop.f32.mrf.mxu0
    %831 = vmatprep.mubr.f32.mxu0 0.0
    %832 = vmatmul.mubr.f32.gmra.mxu0 %v450
    %v833 = vpop.f32.mrf.mxu0
    %v834 = vadd.f32 %v438, %v833
    %v835 = vpop.f32.mrf.mxu0
    %836 = vdwg.mxu0
    %v837 = vsel %vm400, %v397, 0
    %839 = vmatprep.subr.mxu0 0.0
    %840 = vmatpush1.msra.mxu0 0.0
    %841 = vmatprep.subr.mxu0 0.0
    %842 = vmatpush1.msra.mxu0 0.0
    %843 = vmatprep.subr.mxu0 0.0
    %844 = vmatpush1.msra.mxu0 0.0
    %845 = vmatprep.subr.mxu0 0.0
    %846 = vmatpush1.msra.mxu0 0.0
    %847 = vmatprep.subr.mxu0 0.0
    %848 = vmatpush1.msra.mxu0 0.0
    %849 = vmatprep.subr.mxu0 0.0
    %850 = vmatpush1.msra.mxu0 0.0
    %851 = vmatprep.subr.mxu0 0.0
    %852 = vmatpush1.msra.mxu0 0.0
    %853 = vmatprep.subr.mxu0 0.0
    %854 = vmatpush1.msra.mxu0 0.0
    %855 = vmatprep.subr.mxu0 0.0
    %856 = vmatpush1.msra.mxu0 0.0
    %857 = vmatprep.subr.mxu0 0.0
    %858 = vmatpush1.msra.mxu0 0.0
    %859 = vmatprep.subr.mxu0 0.0
    %860 = vmatpush1.msra.mxu0 0.0
    %861 = vmatprep.subr.mxu0 0.0
    %862 = vmatpush1.msra.mxu0 0.0
    %863 = vmatprep.subr.mxu0 0.0
    %864 = vmatpush1.msra.mxu0 0.0
    %865 = vmatprep.subr.mxu0 0.0
    %866 = vmatpush1.msra.mxu0 0.0
    %867 = vmatprep.subr.mxu0 0.0
    %868 = vmatpush1.msra.mxu0 %v837
    %869 = vmatprep.subr.mxu0 0.0
    %870 = vmatpush1.msra.mxu0 %v424
    %871 = vmatprep.subr.mxu0 0.0
    %872 = vmatpush2.msra.mxu0 0.0
    %873 = vmatprep.subr.mxu0 0.0
    %874 = vmatpush2.msra.mxu0 0.0
    %875 = vmatprep.subr.mxu0 0.0
    %876 = vmatpush2.msra.mxu0 0.0
    %877 = vmatprep.subr.mxu0 0.0
    %878 = vmatpush2.msra.mxu0 0.0
    %879 = vmatprep.subr.mxu0 0.0
    %880 = vmatpush2.msra.mxu0 0.0
    %881 = vmatprep.subr.mxu0 0.0
    %882 = vmatpush2.msra.mxu0 0.0
    %883 = vmatprep.subr.mxu0 0.0
    %884 = vmatpush2.msra.mxu0 0.0
    %885 = vmatprep.subr.mxu0 0.0
    %886 = vmatpush2.msra.mxu0 0.0
    %887 = vmatprep.subr.mxu0 0.0
    %888 = vmatpush2.msra.mxu0 0.0
    %889 = vmatprep.subr.mxu0 0.0
    %890 = vmatpush2.msra.mxu0 0.0
    %891 = vmatprep.subr.mxu0 0.0
    %892 = vmatpush2.msra.mxu0 0.0
    %893 = vmatprep.subr.mxu0 0.0
    %894 = vmatpush2.msra.mxu0 0.0
    %895 = vmatprep.subr.mxu0 0.0
    %896 = vmatpush2.msra.mxu0 0.0
    %897 = vmatprep.subr.mxu0 0.0
    %898 = vmatpush2.msra.mxu0 0.0
    %899 = vmatprep.subr.mxu0 0.0
    %900 = vmatpush2.msra.mxu0 0.0
    %901 = vmatprep.subr.mxu0 0.0
    %902 = vmatpush2.msra.mxu0 0.0
    %903 = vmatprep.mubr.f32.mxu0 0.0
    %904 = vmatmul.mubr.f32.gmra.mxu0 %v447
    %v905 = vpop.f32.mrf.mxu0
    %v906 = vadd.f32 %v439, %v905
    %v907 = vpop.f32.mrf.mxu0
    %908 = vmatprep.mubr.f32.mxu0 0.0
    %909 = vmatmul.mubr.f32.gmra.mxu0 %v450
    %v910 = vpop.f32.mrf.mxu0
    %v911 = vadd.f32 %v440, %v910
    %v912 = vpop.f32.mrf.mxu0
    %913 = vdwg.mxu0
    %v914 = vsel %vm400, %v398, 0
    %916 = vmatprep.subr.mxu0 0.0
    %917 = vmatpush1.msra.mxu0 0.0
    %918 = vmatprep.subr.mxu0 0.0
    %919 = vmatpush1.msra.mxu0 0.0
    %920 = vmatprep.subr.mxu0 0.0
    %921 = vmatpush1.msra.mxu0 0.0
    %922 = vmatprep.subr.mxu0 0.0
    %923 = vmatpush1.msra.mxu0 0.0
    %924 = vmatprep.subr.mxu0 0.0
    %925 = vmatpush1.msra.mxu0 0.0
    %926 = vmatprep.subr.mxu0 0.0
    %927 = vmatpush1.msra.mxu0 0.0
    %928 = vmatprep.subr.mxu0 0.0
    %929 = vmatpush1.msra.mxu0 0.0
    %930 = vmatprep.subr.mxu0 0.0
    %931 = vmatpush1.msra.mxu0 0.0
    %932 = vmatprep.subr.mxu0 0.0
    %933 = vmatpush1.msra.mxu0 0.0
    %934 = vmatprep.subr.mxu0 0.0
    %935 = vmatpush1.msra.mxu0 0.0
    %936 = vmatprep.subr.mxu0 0.0
    %937 = vmatpush1.msra.mxu0 0.0
    %938 = vmatprep.subr.mxu0 0.0
    %939 = vmatpush1.msra.mxu0 0.0
    %940 = vmatprep.subr.mxu0 0.0
    %941 = vmatpush1.msra.mxu0 0.0
    %942 = vmatprep.subr.mxu0 0.0
    %943 = vmatpush1.msra.mxu0 0.0
    %944 = vmatprep.subr.mxu0 0.0
    %945 = vmatpush1.msra.mxu0 %v914
    %946 = vmatprep.subr.mxu0 0.0
    %947 = vmatpush1.msra.mxu0 %v425
    %948 = vmatprep.subr.mxu0 0.0
    %949 = vmatpush2.msra.mxu0 0.0
    %950 = vmatprep.subr.mxu0 0.0
    %951 = vmatpush2.msra.mxu0 0.0
    %952 = vmatprep.subr.mxu0 0.0
    %953 = vmatpush2.msra.mxu0 0.0
    %954 = vmatprep.subr.mxu0 0.0
    %955 = vmatpush2.msra.mxu0 0.0
    %956 = vmatprep.subr.mxu0 0.0
    %957 = vmatpush2.msra.mxu0 0.0
    %958 = vmatprep.subr.mxu0 0.0
    %959 = vmatpush2.msra.mxu0 0.0
    %960 = vmatprep.subr.mxu0 0.0
    %961 = vmatpush2.msra.mxu0 0.0
    %962 = vmatprep.subr.mxu0 0.0
    %963 = vmatpush2.msra.mxu0 0.0
    %964 = vmatprep.subr.mxu0 0.0
    %965 = vmatpush2.msra.mxu0 0.0
    %966 = vmatprep.subr.mxu0 0.0
    %967 = vmatpush2.msra.mxu0 0.0
    %968 = vmatprep.subr.mxu0 0.0
    %969 = vmatpush2.msra.mxu0 0.0
    %970 = vmatprep.subr.mxu0 0.0
    %971 = vmatpush2.msra.mxu0 0.0
    %972 = vmatprep.subr.mxu0 0.0
    %973 = vmatpush2.msra.mxu0 0.0
    %974 = vmatprep.subr.mxu0 0.0
    %975 = vmatpush2.msra.mxu0 0.0
    %976 = vmatprep.subr.mxu0 0.0
    %977 = vmatpush2.msra.mxu0 0.0
    %978 = vmatprep.subr.mxu0 0.0
    %979 = vmatpush2.msra.mxu0 0.0
    %980 = vmatprep.mubr.f32.mxu0 0.0
    %981 = vmatmul.mubr.f32.gmra.mxu0 %v447
    %v982 = vpop.f32.mrf.mxu0
    %v983 = vadd.f32 %v441, %v982
    %v984 = vpop.f32.mrf.mxu0
    %985 = vmatprep.mubr.f32.mxu0 0.0
    %986 = vmatmul.mubr.f32.gmra.mxu0 %v450
    %v987 = vpop.f32.mrf.mxu0
    %v988 = vadd.f32 %v442, %v987
    %v989 = vpop.f32.mrf.mxu0
    %990 = vdwg.mxu0
    %v991 = vsel %vm400, %v399, 0
    %993 = vmatprep.subr.mxu0 0.0
    %994 = vmatpush1.msra.mxu0 0.0
    %995 = vmatprep.subr.mxu0 0.0
    %996 = vmatpush1.msra.mxu0 0.0
    %997 = vmatprep.subr.mxu0 0.0
    %998 = vmatpush1.msra.mxu0 0.0
    %999 = vmatprep.subr.mxu0 0.0
    %1000 = vmatpush1.msra.mxu0 0.0
    %1001 = vmatprep.subr.mxu0 0.0
    %1002 = vmatpush1.msra.mxu0 0.0
    %1003 = vmatprep.subr.mxu0 0.0
    %1004 = vmatpush1.msra.mxu0 0.0
    %1005 = vmatprep.subr.mxu0 0.0
    %1006 = vmatpush1.msra.mxu0 0.0
    %1007 = vmatprep.subr.mxu0 0.0
    %1008 = vmatpush1.msra.mxu0 0.0
    %1009 = vmatprep.subr.mxu0 0.0
    %1010 = vmatpush1.msra.mxu0 0.0
    %1011 = vmatprep.subr.mxu0 0.0
    %1012 = vmatpush1.msra.mxu0 0.0
    %1013 = vmatprep.subr.mxu0 0.0
    %1014 = vmatpush1.msra.mxu0 0.0
    %1015 = vmatprep.subr.mxu0 0.0
    %1016 = vmatpush1.msra.mxu0 0.0
    %1017 = vmatprep.subr.mxu0 0.0
    %1018 = vmatpush1.msra.mxu0 0.0
    %1019 = vmatprep.subr.mxu0 0.0
    %1020 = vmatpush1.msra.mxu0 0.0
    %1021 = vmatprep.subr.mxu0 0.0
    %1022 = vmatpush1.msra.mxu0 %v991
    %1023 = vmatprep.subr.mxu0 0.0
    %1024 = vmatpush1.msra.mxu0 %v426
    %1025 = vmatprep.subr.mxu0 0.0
    %1026 = vmatpush2.msra.mxu0 0.0
    %1027 = vmatprep.subr.mxu0 0.0
    %1028 = vmatpush2.msra.mxu0 0.0
    %1029 = vmatprep.subr.mxu0 0.0
    %1030 = vmatpush2.msra.mxu0 0.0
    %1031 = vmatprep.subr.mxu0 0.0
    %1032 = vmatpush2.msra.mxu0 0.0
    %1033 = vmatprep.subr.mxu0 0.0
    %1034 = vmatpush2.msra.mxu0 0.0
    %1035 = vmatprep.subr.mxu0 0.0
    %1036 = vmatpush2.msra.mxu0 0.0
    %1037 = vmatprep.subr.mxu0 0.0
    %1038 = vmatpush2.msra.mxu0 0.0
    %1039 = vmatprep.subr.mxu0 0.0
    %1040 = vmatpush2.msra.mxu0 0.0
    %1041 = vmatprep.subr.mxu0 0.0
    %1042 = vmatpush2.msra.mxu0 0.0
    %1043 = vmatprep.subr.mxu0 0.0
    %1044 = vmatpush2.msra.mxu0 0.0
    %1045 = vmatprep.subr.mxu0 0.0
    %1046 = vmatpush2.msra.mxu0 0.0
    %1047 = vmatprep.subr.mxu0 0.0
    %1048 = vmatpush2.msra.mxu0 0.0
    %1049 = vmatprep.subr.mxu0 0.0
    %1050 = vmatpush2.msra.mxu0 0.0
    %1051 = vmatprep.subr.mxu0 0.0
    %1052 = vmatpush2.msra.mxu0 0.0
    %1053 = vmatprep.subr.mxu0 0.0
    %1054 = vmatpush2.msra.mxu0 0.0
    %1055 = vmatprep.subr.mxu0 0.0
    %1056 = vmatpush2.msra.mxu0 0.0
    %1057 = vmatprep.mubr.f32.mxu0 0.0
    %1058 = vmatmul.mubr.f32.gmra.mxu0 %v447
    %v1059 = vpop.f32.mrf.mxu0
    %v1060 = vadd.f32 %v443, %v1059
    %v1061 = vpop.f32.mrf.mxu0
    %1062 = vmatprep.mubr.f32.mxu0 0.0
    %1063 = vmatmul.mubr.f32.gmra.mxu0 %v450
    %v1064 = vpop.f32.mrf.mxu0
    %v1065 = vadd.f32 %v444, %v1064
    %v1066 = vpop.f32.mrf.mxu0
    %1067 = vdwg.mxu0
    %v1068 = vld [vmem:[%s2] sm:$0xff]
    %v1069 = vld [vmem:[%s2 + $0x8] sm:$0xff]
    %v1070 = vld [vmem:[%s2 + $0x10] sm:$0xff]
    %v1071 = vld [vmem:[%s2 + $0x18] sm:$0xff]
    %v1072 = vld [vmem:[%s2 + $0x20] sm:$0xff]
    %v1073 = vld [vmem:[%s2 + $0x28] sm:$0xff]
    %v1074 = vld [vmem:[%s2 + $0x30] sm:$0xff]
    %v1075 = vld [vmem:[%s2 + $0x38] sm:$0xff]
    %v1076 = vld [vmem:[%s2 + $0x40] sm:$0xff]
    %v1077 = vld [vmem:[%s2 + $0x48] sm:$0xff]
    %v1078 = vld [vmem:[%s2 + $0x50] sm:$0xff]
    %v1079 = vld [vmem:[%s2 + $0x58] sm:$0xff]
    %v1080 = vld [vmem:[%s2 + $0x60] sm:$0xff]
    %v1081 = vld [vmem:[%s2 + $0x68] sm:$0xff]
    %v1082 = vld [vmem:[%s2 + $0x70] sm:$0xff]
    %v1083 = vld [vmem:[%s2 + $0x78] sm:$0xff]
    %1085 = vset.pattern.permute.xlu0 0
    %1086 = vperm.xlu0 %1085, %v1068
    %v1087 = vpop.permute.xlu0 %1086
    %1090 = vset.pattern.permute.xlu0 0
    %1091 = vperm.xlu0 %1090, %v1069
    %v1092 = vpop.permute.xlu0 %1091
    %1095 = vset.pattern.permute.xlu0 0
    %1096 = vperm.xlu0 %1095, %v1070
    %v1097 = vpop.permute.xlu0 %1096
    %1100 = vset.pattern.permute.xlu0 0
    %1101 = vperm.xlu0 %1100, %v1071
    %v1102 = vpop.permute.xlu0 %1101
    %1105 = vset.pattern.permute.xlu0 0
    %1106 = vperm.xlu0 %1105, %v1072
    %v1107 = vpop.permute.xlu0 %1106
    %1110 = vset.pattern.permute.xlu0 0
    %1111 = vperm.xlu0 %1110, %v1073
    %v1112 = vpop.permute.xlu0 %1111
    %1115 = vset.pattern.permute.xlu0 0
    %1116 = vperm.xlu0 %1115, %v1074
    %v1117 = vpop.permute.xlu0 %1116
    %1120 = vset.pattern.permute.xlu0 0
    %1121 = vperm.xlu0 %1120, %v1075
    %v1122 = vpop.permute.xlu0 %1121
    %1125 = vset.pattern.permute.xlu0 0
    %1126 = vperm.xlu0 %1125, %v1076
    %v1127 = vpop.permute.xlu0 %1126
    %1130 = vset.pattern.permute.xlu0 0
    %1131 = vperm.xlu0 %1130, %v1077
    %v1132 = vpop.permute.xlu0 %1131
    %1135 = vset.pattern.permute.xlu0 0
    %1136 = vperm.xlu0 %1135, %v1078
    %v1137 = vpop.permute.xlu0 %1136
    %1140 = vset.pattern.permute.xlu0 0
    %1141 = vperm.xlu0 %1140, %v1079
    %v1142 = vpop.permute.xlu0 %1141
    %1145 = vset.pattern.permute.xlu0 0
    %1146 = vperm.xlu0 %1145, %v1080
    %v1147 = vpop.permute.xlu0 %1146
    %1150 = vset.pattern.permute.xlu0 0
    %1151 = vperm.xlu0 %1150, %v1081
    %v1152 = vpop.permute.xlu0 %1151
    %1155 = vset.pattern.permute.xlu0 0
    %1156 = vperm.xlu0 %1155, %v1082
    %v1157 = vpop.permute.xlu0 %1156
    %1160 = vset.pattern.permute.xlu0 0
    %1161 = vperm.xlu0 %1160, %v1083
    %v1162 = vpop.permute.xlu0 %1161
    %v1164 = vadd.f32 %v521, %v1087
    %v1165 = vadd.f32 %v526, %v1092
    %v1166 = vadd.f32 %v598, %v1097
    %v1167 = vadd.f32 %v603, %v1102
    %v1168 = vadd.f32 %v675, %v1107
    %v1169 = vadd.f32 %v680, %v1112
    %v1170 = vadd.f32 %v752, %v1117
    %v1171 = vadd.f32 %v757, %v1122
    %v1172 = vadd.f32 %v829, %v1127
    %v1173 = vadd.f32 %v834, %v1132
    %v1174 = vadd.f32 %v906, %v1137
    %v1175 = vadd.f32 %v911, %v1142
    %v1176 = vadd.f32 %v983, %v1147
    %v1177 = vadd.f32 %v988, %v1152
    %v1178 = vadd.f32 %v1060, %v1157
    %v1179 = vadd.f32 %v1065, %v1162
    %v1180 = vtanh.pop %v1164
    %v1181 = vtanh.pop %v1165
    %v1182 = vtanh.pop %v1166
    %v1183 = vtanh.pop %v1167
    %v1184 = vtanh.pop %v1168
    %v1185 = vtanh.pop %v1169
    %v1186 = vtanh.pop %v1170
    %v1187 = vtanh.pop %v1171
    %v1188 = vtanh.pop %v1172
    %v1189 = vtanh.pop %v1173
    %v1190 = vtanh.pop %v1174
    %v1191 = vtanh.pop %v1175
    %v1192 = vtanh.pop %v1176
    %v1193 = vtanh.pop %v1177
    %v1194 = vtanh.pop %v1178
    %v1195 = vtanh.pop %v1179
    %v1196 = vld [vmem:[%s6] sm:$0xff]
    %v1197 = vld [vmem:[%s6 + $0x8] sm:$0xff]
    %1199 = vset.pattern.permute.xlu0 0
    %1200 = vperm.xlu0 %1199, %v1196
    %v1201 = vpop.permute.xlu0 %1200
    %1204 = vset.pattern.permute.xlu0 0
    %1205 = vperm.xlu0 %1204, %v1197
    %v1206 = vpop.permute.xlu0 %1205
    %v1208 = vmul.f32 %v1180, %v1201
    %v1209 = vmul.f32 %v1181, %v1206
    %v1210 = vmul.f32 %v1182, %v1201
    %v1211 = vmul.f32 %v1183, %v1206
    %v1212 = vmul.f32 %v1184, %v1201
    %v1213 = vmul.f32 %v1185, %v1206
    %v1214 = vmul.f32 %v1186, %v1201
    %v1215 = vmul.f32 %v1187, %v1206
    %v1216 = vmul.f32 %v1188, %v1201
    %v1217 = vmul.f32 %v1189, %v1206
    %v1218 = vmul.f32 %v1190, %v1201
    %v1219 = vmul.f32 %v1191, %v1206
    %v1220 = vmul.f32 %v1192, %v1201
    %v1221 = vmul.f32 %v1193, %v1206
    %v1222 = vmul.f32 %v1194, %v1201
    %v1223 = vmul.f32 %v1195, %v1206
    %v1224 = vadd.f32 %v1208, %v1209
    %v1225 = vrot.slane %v1224, 4
    %v1226 = vadd.f32 %v1224, %v1225
    %v1227 = vrot.slane %v1226, 2
    %v1228 = vadd.f32 %v1226, %v1227
    %v1229 = vrot.slane %v1228, 1
    %v1230 = vadd.f32 %v1228, %v1229
    %v1231 = vadd.f32 %v1210, %v1211
    %v1232 = vrot.slane %v1231, 4
    %v1233 = vadd.f32 %v1231, %v1232
    %v1234 = vrot.slane %v1233, 2
    %v1235 = vadd.f32 %v1233, %v1234
    %v1236 = vrot.slane %v1235, 1
    %v1237 = vadd.f32 %v1235, %v1236
    %v1238 = vadd.f32 %v1212, %v1213
    %v1239 = vrot.slane %v1238, 4
    %v1240 = vadd.f32 %v1238, %v1239
    %v1241 = vrot.slane %v1240, 2
    %v1242 = vadd.f32 %v1240, %v1241
    %v1243 = vrot.slane %v1242, 1
    %v1244 = vadd.f32 %v1242, %v1243
    %v1245 = vadd.f32 %v1214, %v1215
    %v1246 = vrot.slane %v1245, 4
    %v1247 = vadd.f32 %v1245, %v1246
    %v1248 = vrot.slane %v1247, 2
    %v1249 = vadd.f32 %v1247, %v1248
    %v1250 = vrot.slane %v1249, 1
    %v1251 = vadd.f32 %v1249, %v1250
    %v1252 = vadd.f32 %v1216, %v1217
    %v1253 = vrot.slane %v1252, 4
    %v1254 = vadd.f32 %v1252, %v1253
    %v1255 = vrot.slane %v1254, 2
    %v1256 = vadd.f32 %v1254, %v1255
    %v1257 = vrot.slane %v1256, 1
    %v1258 = vadd.f32 %v1256, %v1257
    %v1259 = vadd.f32 %v1218, %v1219
    %v1260 = vrot.slane %v1259, 4
    %v1261 = vadd.f32 %v1259, %v1260
    %v1262 = vrot.slane %v1261, 2
    %v1263 = vadd.f32 %v1261, %v1262
    %v1264 = vrot.slane %v1263, 1
    %v1265 = vadd.f32 %v1263, %v1264
    %v1266 = vadd.f32 %v1220, %v1221
    %v1267 = vrot.slane %v1266, 4
    %v1268 = vadd.f32 %v1266, %v1267
    %v1269 = vrot.slane %v1268, 2
    %v1270 = vadd.f32 %v1268, %v1269
    %v1271 = vrot.slane %v1270, 1
    %v1272 = vadd.f32 %v1270, %v1271
    %v1273 = vadd.f32 %v1222, %v1223
    %v1274 = vrot.slane %v1273, 4
    %v1275 = vadd.f32 %v1273, %v1274
    %v1276 = vrot.slane %v1275, 2
    %v1277 = vadd.f32 %v1275, %v1276
    %v1278 = vrot.slane %v1277, 1
    %v1279 = vadd.f32 %v1277, %v1278
    %v1280 = vld [vmem:[%s4] sm:$0xff]
    %v1282 = vrot.slane %v1280, 1
    %v1283 = vrot.slane %v1280, 2
    %v1284 = vrot.slane %v1280, 3
    %v1285 = vrot.slane %v1280, 4
    %v1286 = vrot.slane %v1280, 5
    %v1287 = vrot.slane %v1280, 6
    %v1288 = vrot.slane %v1280, 7
    %v1297 = vadd.f32 %v1230, %v1280
    %v1298 = vadd.f32 %v1237, %v1282
    %v1299 = vadd.f32 %v1244, %v1283
    %v1300 = vadd.f32 %v1251, %v1284
    %v1301 = vadd.f32 %v1258, %v1285
    %v1302 = vadd.f32 %v1265, %v1286
    %v1303 = vadd.f32 %v1272, %v1287
    %v1304 = vadd.f32 %v1279, %v1288
    %v1313 = vrot.slane %v1298, 7
    %vm1314 = vcmask 1041409
    %v1315 = vsel %vm1314, %v1313, %v1297
    %v1316 = vrot.slane %v1299, 6
    %vm1317 = vcmask 1042434
    %v1318 = vsel %vm1317, %v1316, %v1315
    %v1319 = vrot.slane %v1300, 5
    %vm1320 = vcmask 1043459
    %v1321 = vsel %vm1320, %v1319, %v1318
    %v1322 = vrot.slane %v1301, 4
    %vm1323 = vcmask 1044484
    %v1324 = vsel %vm1323, %v1322, %v1321
    %v1325 = vrot.slane %v1302, 3
    %vm1326 = vcmask 1045509
    %v1327 = vsel %vm1326, %v1325, %v1324
    %v1328 = vrot.slane %v1303, 2
    %vm1329 = vcmask 1046534
    %v1330 = vsel %vm1329, %v1328, %v1327
    %v1331 = vrot.slane %v1304, 1
    %vm1332 = vcmask 1047559
    %v1333 = vsel %vm1332, %v1331, %v1330
    %1335 = vmax.xlane.f32.xlu0 %v1333
    %v1336 = vpop.xlane.xlu0 %1335
    %v1338 = vrot.slane %v1336, 1
    %v1339 = vrot.slane %v1336, 2
    %v1340 = vrot.slane %v1336, 3
    %v1341 = vrot.slane %v1336, 4
    %v1342 = vrot.slane %v1336, 5
    %v1343 = vrot.slane %v1336, 6
    %v1344 = vrot.slane %v1336, 7
    %v1353 = vsub.f32 %v1297, %v1336
    %v1354 = vsub.f32 %v1298, %v1338
    %v1355 = vsub.f32 %v1299, %v1339
    %v1356 = vsub.f32 %v1300, %v1340
    %v1357 = vsub.f32 %v1301, %v1341
    %v1358 = vsub.f32 %v1302, %v1342
    %v1359 = vsub.f32 %v1303, %v1343
    %v1360 = vsub.f32 %v1304, %v1344
    %v1361 = vmul.f32 %v1353, 1.442695
    %v1362 = vpow.pop %v1361
    %v1363 = vmul.f32 %v1354, 1.442695
    %v1364 = vpow.pop %v1363
    %v1365 = vmul.f32 %v1355, 1.442695
    %v1366 = vpow.pop %v1365
    %v1367 = vmul.f32 %v1356, 1.442695
    %v1368 = vpow.pop %v1367
    %v1369 = vmul.f32 %v1357, 1.442695
    %v1370 = vpow.pop %v1369
    %v1371 = vmul.f32 %v1358, 1.442695
    %v1372 = vpow.pop %v1371
    %v1373 = vmul.f32 %v1359, 1.442695
    %v1374 = vpow.pop %v1373
    %v1375 = vmul.f32 %v1360, 1.442695
    %v1376 = vpow.pop %v1375
    %v1385 = vrot.slane %v1364, 7
    %v1386 = vsel %vm1314, %v1385, %v1362
    %v1387 = vrot.slane %v1366, 6
    %v1388 = vsel %vm1317, %v1387, %v1386
    %v1389 = vrot.slane %v1368, 5
    %v1390 = vsel %vm1320, %v1389, %v1388
    %v1391 = vrot.slane %v1370, 4
    %v1392 = vsel %vm1323, %v1391, %v1390
    %v1393 = vrot.slane %v1372, 3
    %v1394 = vsel %vm1326, %v1393, %v1392
    %v1395 = vrot.slane %v1374, 2
    %v1396 = vsel %vm1329, %v1395, %v1394
    %v1397 = vrot.slane %v1376, 1
    %v1398 = vsel %vm1332, %v1397, %v1396
    %1400 = vadd.xlane.f32.xlu0 %v1398
    %v1401 = vpop.xlane.xlu0 %1400
    %v1402 = vrcp.pop %v1401
    %v1403 = vmul.f32 %v1401, %v1402
    %v1404 = vsub.f32 2.0, %v1403
    %v1405 = vmul.f32 %v1402, %v1404
    %v1407 = vrot.slane %v1405, 1
    %v1408 = vrot.slane %v1405, 2
    %v1409 = vrot.slane %v1405, 3
    %v1410 = vrot.slane %v1405, 4
    %v1411 = vrot.slane %v1405, 5
    %v1412 = vrot.slane %v1405, 6
    %v1413 = vrot.slane %v1405, 7
    %v1422 = vmul.f32 %v1362, %v1405
    %v1423 = vmul.f32 %v1364, %v1407
    %v1424 = vmul.f32 %v1366, %v1408
    %v1425 = vmul.f32 %v1368, %v1409
    %v1426 = vmul.f32 %v1370, %v1410
    %v1427 = vmul.f32 %v1372, %v1411
    %v1428 = vmul.f32 %v1374, %v1412
    %v1429 = vmul.f32 %v1376, %v1413
    %v1438 = vrot.slane %v1423, 7
    %v1439 = vsel %vm1314, %v1438, %v1422
    %v1440 = vrot.slane %v1424, 6
    %v1441 = vsel %vm1317, %v1440, %v1439
    %v1442 = vrot.slane %v1425, 5
    %v1443 = vsel %vm1320, %v1442, %v1441
    %v1444 = vrot.slane %v1426, 4
    %v1445 = vsel %vm1323, %v1444, %v1443
    %v1446 = vrot.slane %v1427, 3
    %v1447 = vsel %vm1326, %v1446, %v1445
    %v1448 = vrot.slane %v1428, 2
    %v1449 = vsel %vm1329, %v1448, %v1447
    %v1450 = vrot.slane %v1429, 1
    %v1451 = vsel %vm1332, %v1450, %v1449
    %1453 = vst [vmem:[#allocation6] sm:$0xff] %v1451
    %v1454 = vld [vmem:[#allocation2] sm:$0xff]
    %v1455 = vld [vmem:[#allocation2 + $0x8] sm:$0xff]
    %v1456 = vld [vmem:[#allocation2 + $0x10] sm:$0xff]
    %v1457 = vld [vmem:[#allocation2 + $0x18] sm:$0xff]
    %v1458 = vld [vmem:[#allocation2 + $0x20] sm:$0xff]
    %v1459 = vld [vmem:[#allocation2 + $0x28] sm:$0xff]
    %v1460 = vld [vmem:[#allocation2 + $0x30] sm:$0xff]
    %v1461 = vld [vmem:[#allocation2 + $0x38] sm:$0xff]
    %v1462 = vld [vmem:[#allocation2 + $0x40] sm:$0xff]
    %v1463 = vld [vmem:[#allocation2 + $0x48] sm:$0xff]
    %v1464 = vld [vmem:[#allocation2 + $0x50] sm:$0xff]
    %v1465 = vld [vmem:[#allocation2 + $0x58] sm:$0xff]
    %v1466 = vld [vmem:[#allocation2 + $0x60] sm:$0xff]
    %v1467 = vld [vmem:[#allocation2 + $0x68] sm:$0xff]
    %v1468 = vld [vmem:[#allocation2 + $0x70] sm:$0xff]
    %v1469 = vld [vmem:[#allocation2 + $0x78] sm:$0xff]
    %v1470 = vld [vmem:[#allocation2 + $0x80] sm:$0xff]
    %v1471 = vld [vmem:[#allocation2 + $0x88] sm:$0xff]
    %v1472 = vld [vmem:[#allocation2 + $0x90] sm:$0xff]
    %v1473 = vld [vmem:[#allocation2 + $0x98] sm:$0xff]
    %v1474 = vld [vmem:[#allocation2 + $0xa0] sm:$0xff]
    %v1475 = vld [vmem:[#allocation2 + $0xa8] sm:$0xff]
    %v1476 = vld [vmem:[#allocation2 + $0xb0] sm:$0xff]
    %v1477 = vld [vmem:[#allocation2 + $0xb8] sm:$0xff]
    %v1478 = vld [vmem:[#allocation2 + $0xc0] sm:$0xff]
    %v1479 = vld [vmem:[#allocation2 + $0xc8] sm:$0xff]
    %v1480 = vld [vmem:[#allocation2 + $0xd0] sm:$0xff]
    %v1481 = vld [vmem:[#allocation2 + $0xd8] sm:$0xff]
    %v1482 = vld [vmem:[#allocation2 + $0xe0] sm:$0xff]
    %v1483 = vld [vmem:[#allocation2 + $0xe8] sm:$0xff]
    %v1484 = vld [vmem:[#allocation2 + $0xf0] sm:$0xff]
    %v1485 = vld [vmem:[#allocation2 + $0xf8] sm:$0xff]
    %v1486 = vld [vmem:[#allocation2 + $0x100] sm:$0xff]
    %v1487 = vld [vmem:[#allocation2 + $0x108] sm:$0xff]
    %v1488 = vld [vmem:[#allocation2 + $0x110] sm:$0xff]
    %v1489 = vld [vmem:[#allocation2 + $0x118] sm:$0xff]
    %v1490 = vld [vmem:[#allocation2 + $0x120] sm:$0xff]
    %v1491 = vld [vmem:[#allocation2 + $0x128] sm:$0xff]
    %v1492 = vld [vmem:[#allocation2 + $0x130] sm:$0xff]
    %v1493 = vld [vmem:[#allocation2 + $0x138] sm:$0xff]
    %v1494 = vld [vmem:[#allocation2 + $0x140] sm:$0xff]
    %v1495 = vld [vmem:[#allocation2 + $0x148] sm:$0xff]
    %v1496 = vld [vmem:[#allocation2 + $0x150] sm:$0xff]
    %v1497 = vld [vmem:[#allocation2 + $0x158] sm:$0xff]
    %v1498 = vld [vmem:[#allocation2 + $0x160] sm:$0xff]
    %v1499 = vld [vmem:[#allocation2 + $0x168] sm:$0xff]
    %v1500 = vld [vmem:[#allocation2 + $0x170] sm:$0xff]
    %v1501 = vld [vmem:[#allocation2 + $0x178] sm:$0xff]
    %v1502 = vld [vmem:[#allocation2 + $0x180] sm:$0xff]
    %v1503 = vld [vmem:[#allocation2 + $0x188] sm:$0xff]
    %v1504 = vld [vmem:[#allocation2 + $0x190] sm:$0xff]
    %v1505 = vld [vmem:[#allocation2 + $0x198] sm:$0xff]
    %v1506 = vld [vmem:[#allocation2 + $0x1a0] sm:$0xff]
    %v1507 = vld [vmem:[#allocation2 + $0x1a8] sm:$0xff]
    %v1508 = vld [vmem:[#allocation2 + $0x1b0] sm:$0xff]
    %v1509 = vld [vmem:[#allocation2 + $0x1b8] sm:$0xff]
    %v1510 = vld [vmem:[#allocation2 + $0x1c0] sm:$0xff]
    %v1511 = vld [vmem:[#allocation2 + $0x1c8] sm:$0xff]
    %v1512 = vld [vmem:[#allocation2 + $0x1d0] sm:$0xff]
    %v1513 = vld [vmem:[#allocation2 + $0x1d8] sm:$0xff]
    %v1514 = vld [vmem:[#allocation2 + $0x1e0] sm:$0xff]
    %v1515 = vld [vmem:[#allocation2 + $0x1e8] sm:$0xff]
    %v1516 = vld [vmem:[#allocation2 + $0x1f0] sm:$0xff]
    %v1517 = vld [vmem:[#allocation2 + $0x1f8] sm:$0xff]
    %v1518 = vld [vmem:[#allocation2 + $0x200] sm:$0xff]
    %v1519 = vld [vmem:[#allocation2 + $0x208] sm:$0xff]
    %v1520 = vld [vmem:[#allocation2 + $0x210] sm:$0xff]
    %v1521 = vld [vmem:[#allocation2 + $0x218] sm:$0xff]
    %v1522 = vld [vmem:[#allocation2 + $0x220] sm:$0xff]
    %v1523 = vld [vmem:[#allocation2 + $0x228] sm:$0xff]
    %v1524 = vld [vmem:[#allocation2 + $0x230] sm:$0xff]
    %v1525 = vld [vmem:[#allocation2 + $0x238] sm:$0xff]
    %v1526 = vld [vmem:[#allocation2 + $0x240] sm:$0xff]
    %v1527 = vld [vmem:[#allocation2 + $0x248] sm:$0xff]
    %v1528 = vld [vmem:[#allocation2 + $0x250] sm:$0xff]
    %v1529 = vld [vmem:[#allocation2 + $0x258] sm:$0xff]
    %v1530 = vld [vmem:[#allocation2 + $0x260] sm:$0xff]
    %v1531 = vld [vmem:[#allocation2 + $0x268] sm:$0xff]
    %v1532 = vld [vmem:[#allocation2 + $0x270] sm:$0xff]
    %v1533 = vld [vmem:[#allocation2 + $0x278] sm:$0xff]
    %v1534 = vld [vmem:[#allocation2 + $0x280] sm:$0xff]
    %v1535 = vld [vmem:[#allocation2 + $0x288] sm:$0xff]
    %v1536 = vld [vmem:[#allocation2 + $0x290] sm:$0xff]
    %v1537 = vld [vmem:[#allocation2 + $0x298] sm:$0xff]
    %v1538 = vld [vmem:[#allocation2 + $0x2a0] sm:$0xff]
    %v1539 = vld [vmem:[#allocation2 + $0x2a8] sm:$0xff]
    %v1540 = vld [vmem:[#allocation2 + $0x2b0] sm:$0xff]
    %v1541 = vld [vmem:[#allocation2 + $0x2b8] sm:$0xff]
    %v1542 = vld [vmem:[#allocation2 + $0x2c0] sm:$0xff]
    %v1543 = vld [vmem:[#allocation2 + $0x2c8] sm:$0xff]
    %v1544 = vld [vmem:[#allocation2 + $0x2d0] sm:$0xff]
    %v1545 = vld [vmem:[#allocation2 + $0x2d8] sm:$0xff]
    %v1546 = vld [vmem:[#allocation2 + $0x2e0] sm:$0xff]
    %v1547 = vld [vmem:[#allocation2 + $0x2e8] sm:$0xff]
    %v1548 = vld [vmem:[#allocation2 + $0x2f0] sm:$0xff]
    %v1549 = vld [vmem:[#allocation2 + $0x2f8] sm:$0xff]
    %v1550 = vld [vmem:[#allocation2 + $0x300] sm:$0xff]
    %v1551 = vld [vmem:[#allocation2 + $0x308] sm:$0xff]
    %v1552 = vld [vmem:[#allocation2 + $0x310] sm:$0xff]
    %v1553 = vld [vmem:[#allocation2 + $0x318] sm:$0xff]
    %v1554 = vld [vmem:[#allocation2 + $0x320] sm:$0xff]
    %v1555 = vld [vmem:[#allocation2 + $0x328] sm:$0xff]
    %v1556 = vld [vmem:[#allocation2 + $0x330] sm:$0xff]
    %v1557 = vld [vmem:[#allocation2 + $0x338] sm:$0xff]
    %v1558 = vld [vmem:[#allocation2 + $0x340] sm:$0xff]
    %v1559 = vld [vmem:[#allocation2 + $0x348] sm:$0xff]
    %v1560 = vld [vmem:[#allocation2 + $0x350] sm:$0xff]
    %v1561 = vld [vmem:[#allocation2 + $0x358] sm:$0xff]
    %v1562 = vld [vmem:[#allocation2 + $0x360] sm:$0xff]
    %v1563 = vld [vmem:[#allocation2 + $0x368] sm:$0xff]
    %v1564 = vld [vmem:[#allocation2 + $0x370] sm:$0xff]
    %v1565 = vld [vmem:[#allocation2 + $0x378] sm:$0xff]
    %v1566 = vld [vmem:[#allocation2 + $0x380] sm:$0xff]
    %v1567 = vld [vmem:[#allocation2 + $0x388] sm:$0xff]
    %v1568 = vld [vmem:[#allocation2 + $0x390] sm:$0xff]
    %v1569 = vld [vmem:[#allocation2 + $0x398] sm:$0xff]
    %v1570 = vld [vmem:[#allocation2 + $0x3a0] sm:$0xff]
    %v1571 = vld [vmem:[#allocation2 + $0x3a8] sm:$0xff]
    %v1572 = vld [vmem:[#allocation2 + $0x3b0] sm:$0xff]
    %v1573 = vld [vmem:[#allocation2 + $0x3b8] sm:$0xff]
    %v1574 = vld [vmem:[#allocation2 + $0x3c0] sm:$0xff]
    %v1575 = vld [vmem:[#allocation2 + $0x3c8] sm:$0xff]
    %v1576 = vld [vmem:[#allocation2 + $0x3d0] sm:$0xff]
    %v1577 = vld [vmem:[#allocation2 + $0x3d8] sm:$0xff]
    %v1578 = vld [vmem:[#allocation2 + $0x3e0] sm:$0xff]
    %v1579 = vld [vmem:[#allocation2 + $0x3e8] sm:$0xff]
    %v1580 = vld [vmem:[#allocation2 + $0x3f0] sm:$0xff]
    %v1581 = vld [vmem:[#allocation2 + $0x3f8] sm:$0xff]
    %1582 = vmatprep.subr.mxu0 0.0
    %1583 = vmatpush1.msra.mxu0 %v1469
    %1584 = vmatprep.subr.mxu0 0.0
    %1585 = vmatpush1.msra.mxu0 %v1468
    %1586 = vmatprep.subr.mxu0 0.0
    %1587 = vmatpush1.msra.mxu0 %v1467
    %1588 = vmatprep.subr.mxu0 0.0
    %1589 = vmatpush1.msra.mxu0 %v1466
    %1590 = vmatprep.subr.mxu0 0.0
    %1591 = vmatpush1.msra.mxu0 %v1465
    %1592 = vmatprep.subr.mxu0 0.0
    %1593 = vmatpush1.msra.mxu0 %v1464
    %1594 = vmatprep.subr.mxu0 0.0
    %1595 = vmatpush1.msra.mxu0 %v1463
    %1596 = vmatprep.subr.mxu0 0.0
    %1597 = vmatpush1.msra.mxu0 %v1462
    %1598 = vmatprep.subr.mxu0 0.0
    %1599 = vmatpush1.msra.mxu0 %v1461
    %1600 = vmatprep.subr.mxu0 0.0
    %1601 = vmatpush1.msra.mxu0 %v1460
    %1602 = vmatprep.subr.mxu0 0.0
    %1603 = vmatpush1.msra.mxu0 %v1459
    %1604 = vmatprep.subr.mxu0 0.0
    %1605 = vmatpush1.msra.mxu0 %v1458
    %1606 = vmatprep.subr.mxu0 0.0
    %1607 = vmatpush1.msra.mxu0 %v1457
    %1608 = vmatprep.subr.mxu0 0.0
    %1609 = vmatpush1.msra.mxu0 %v1456
    %1610 = vmatprep.subr.mxu0 0.0
    %1611 = vmatpush1.msra.mxu0 %v1455
    %1612 = vmatprep.subr.mxu0 0.0
    %1613 = vmatpush1.msra.mxu0 %v1454
    %1614 = vmatprep.subr.mxu0 0.0
    %1615 = vmatpush2.msra.mxu0 0.0
    %1616 = vmatprep.subr.mxu0 0.0
    %1617 = vmatpush2.msra.mxu0 0.0
    %1618 = vmatprep.subr.mxu0 0.0
    %1619 = vmatpush2.msra.mxu0 0.0
    %1620 = vmatprep.subr.mxu0 0.0
    %1621 = vmatpush2.msra.mxu0 0.0
    %1622 = vmatprep.subr.mxu0 0.0
    %1623 = vmatpush2.msra.mxu0 0.0
    %1624 = vmatprep.subr.mxu0 0.0
    %1625 = vmatpush2.msra.mxu0 0.0
    %1626 = vmatprep.subr.mxu0 0.0
    %1627 = vmatpush2.msra.mxu0 0.0
    %1628 = vmatprep.subr.mxu0 0.0
    %1629 = vmatpush2.msra.mxu0 0.0
    %1630 = vmatprep.subr.mxu0 0.0
    %1631 = vmatpush2.msra.mxu0 0.0
    %1632 = vmatprep.subr.mxu0 0.0
    %1633 = vmatpush2.msra.mxu0 0.0
    %1634 = vmatprep.subr.mxu0 0.0
    %1635 = vmatpush2.msra.mxu0 0.0
    %1636 = vmatprep.subr.mxu0 0.0
    %1637 = vmatpush2.msra.mxu0 0.0
    %1638 = vmatprep.subr.mxu0 0.0
    %1639 = vmatpush2.msra.mxu0 0.0
    %1640 = vmatprep.subr.mxu0 0.0
    %1641 = vmatpush2.msra.mxu0 0.0
    %1642 = vmatprep.subr.mxu0 0.0
    %1643 = vmatpush2.msra.mxu0 0.0
    %1644 = vmatprep.subr.mxu0 0.0
    %1645 = vmatpush2.msra.mxu0 0.0
    %1646 = vmatprep.mubr.f32.mxu0 0.0
    %1647 = vmatmul.mubr.f32.gmra.mxu0 %v1422
    %v1648 = vpop.f32.mrf.mxu0
    %v1649 = vadd.f32 0.0, %v1648
    %v1650 = vpop.f32.mrf.mxu0
    %1651 = vdwg.mxu0
    %1652 = vmatprep.subr.mxu0 0.0
    %1653 = vmatpush1.msra.mxu0 %v1485
    %1654 = vmatprep.subr.mxu0 0.0
    %1655 = vmatpush1.msra.mxu0 %v1484
    %1656 = vmatprep.subr.mxu0 0.0
    %1657 = vmatpush1.msra.mxu0 %v1483
    %1658 = vmatprep.subr.mxu0 0.0
    %1659 = vmatpush1.msra.mxu0 %v1482
    %1660 = vmatprep.subr.mxu0 0.0
    %1661 = vmatpush1.msra.mxu0 %v1481
    %1662 = vmatprep.subr.mxu0 0.0
    %1663 = vmatpush1.msra.mxu0 %v1480
    %1664 = vmatprep.subr.mxu0 0.0
    %1665 = vmatpush1.msra.mxu0 %v1479
    %1666 = vmatprep.subr.mxu0 0.0
    %1667 = vmatpush1.msra.mxu0 %v1478
    %1668 = vmatprep.subr.mxu0 0.0
    %1669 = vmatpush1.msra.mxu0 %v1477
    %1670 = vmatprep.subr.mxu0 0.0
    %1671 = vmatpush1.msra.mxu0 %v1476
    %1672 = vmatprep.subr.mxu0 0.0
    %1673 = vmatpush1.msra.mxu0 %v1475
    %1674 = vmatprep.subr.mxu0 0.0
    %1675 = vmatpush1.msra.mxu0 %v1474
    %1676 = vmatprep.subr.mxu0 0.0
    %1677 = vmatpush1.msra.mxu0 %v1473
    %1678 = vmatprep.subr.mxu0 0.0
    %1679 = vmatpush1.msra.mxu0 %v1472
    %1680 = vmatprep.subr.mxu0 0.0
    %1681 = vmatpush1.msra.mxu0 %v1471
    %1682 = vmatprep.subr.mxu0 0.0
    %1683 = vmatpush1.msra.mxu0 %v1470
    %1684 = vmatprep.subr.mxu0 0.0
    %1685 = vmatpush2.msra.mxu0 0.0
    %1686 = vmatprep.subr.mxu0 0.0
    %1687 = vmatpush2.msra.mxu0 0.0
    %1688 = vmatprep.subr.mxu0 0.0
    %1689 = vmatpush2.msra.mxu0 0.0
    %1690 = vmatprep.subr.mxu0 0.0
    %1691 = vmatpush2.msra.mxu0 0.0
    %1692 = vmatprep.subr.mxu0 0.0
    %1693 = vmatpush2.msra.mxu0 0.0
    %1694 = vmatprep.subr.mxu0 0.0
    %1695 = vmatpush2.msra.mxu0 0.0
    %1696 = vmatprep.subr.mxu0 0.0
    %1697 = vmatpush2.msra.mxu0 0.0
    %1698 = vmatprep.subr.mxu0 0.0
    %1699 = vmatpush2.msra.mxu0 0.0
    %1700 = vmatprep.subr.mxu0 0.0
    %1701 = vmatpush2.msra.mxu0 0.0
    %1702 = vmatprep.subr.mxu0 0.0
    %1703 = vmatpush2.msra.mxu0 0.0
    %1704 = vmatprep.subr.mxu0 0.0
    %1705 = vmatpush2.msra.mxu0 0.0
    %1706 = vmatprep.subr.mxu0 0.0
    %1707 = vmatpush2.msra.mxu0 0.0
    %1708 = vmatprep.subr.mxu0 0.0
    %1709 = vmatpush2.msra.mxu0 0.0
    %1710 = vmatprep.subr.mxu0 0.0
    %1711 = vmatpush2.msra.mxu0 0.0
    %1712 = vmatprep.subr.mxu0 0.0
    %1713 = vmatpush2.msra.mxu0 0.0
    %1714 = vmatprep.subr.mxu0 0.0
    %1715 = vmatpush2.msra.mxu0 0.0
    %1716 = vmatprep.mubr.f32.mxu0 0.0
    %1717 = vmatmul.mubr.f32.gmra.mxu0 %v1423
    %v1718 = vpop.f32.mrf.mxu0
    %v1719 = vadd.f32 0.0, %v1718
    %v1720 = vpop.f32.mrf.mxu0
    %1721 = vdwg.mxu0
    %1722 = vmatprep.subr.mxu0 0.0
    %1723 = vmatpush1.msra.mxu0 %v1501
    %1724 = vmatprep.subr.mxu0 0.0
    %1725 = vmatpush1.msra.mxu0 %v1500
    %1726 = vmatprep.subr.mxu0 0.0
    %1727 = vmatpush1.msra.mxu0 %v1499
    %1728 = vmatprep.subr.mxu0 0.0
    %1729 = vmatpush1.msra.mxu0 %v1498
    %1730 = vmatprep.subr.mxu0 0.0
    %1731 = vmatpush1.msra.mxu0 %v1497
    %1732 = vmatprep.subr.mxu0 0.0
    %1733 = vmatpush1.msra.mxu0 %v1496
    %1734 = vmatprep.subr.mxu0 0.0
    %1735 = vmatpush1.msra.mxu0 %v1495
    %1736 = vmatprep.subr.mxu0 0.0
    %1737 = vmatpush1.msra.mxu0 %v1494
    %1738 = vmatprep.subr.mxu0 0.0
    %1739 = vmatpush1.msra.mxu0 %v1493
    %1740 = vmatprep.subr.mxu0 0.0
    %1741 = vmatpush1.msra.mxu0 %v1492
    %1742 = vmatprep.subr.mxu0 0.0
    %1743 = vmatpush1.msra.mxu0 %v1491
    %1744 = vmatprep.subr.mxu0 0.0
    %1745 = vmatpush1.msra.mxu0 %v1490
    %1746 = vmatprep.subr.mxu0 0.0
    %1747 = vmatpush1.msra.mxu0 %v1489
    %1748 = vmatprep.subr.mxu0 0.0
    %1749 = vmatpush1.msra.mxu0 %v1488
    %1750 = vmatprep.subr.mxu0 0.0
    %1751 = vmatpush1.msra.mxu0 %v1487
    %1752 = vmatprep.subr.mxu0 0.0
    %1753 = vmatpush1.msra.mxu0 %v1486
    %1754 = vmatprep.subr.mxu0 0.0
    %1755 = vmatpush2.msra.mxu0 0.0
    %1756 = vmatprep.subr.mxu0 0.0
    %1757 = vmatpush2.msra.mxu0 0.0
    %1758 = vmatprep.subr.mxu0 0.0
    %1759 = vmatpush2.msra.mxu0 0.0
    %1760 = vmatprep.subr.mxu0 0.0
    %1761 = vmatpush2.msra.mxu0 0.0
    %1762 = vmatprep.subr.mxu0 0.0
    %1763 = vmatpush2.msra.mxu0 0.0
    %1764 = vmatprep.subr.mxu0 0.0
    %1765 = vmatpush2.msra.mxu0 0.0
    %1766 = vmatprep.subr.mxu0 0.0
    %1767 = vmatpush2.msra.mxu0 0.0
    %1768 = vmatprep.subr.mxu0 0.0
    %1769 = vmatpush2.msra.mxu0 0.0
    %1770 = vmatprep.subr.mxu0 0.0
    %1771 = vmatpush2.msra.mxu0 0.0
    %1772 = vmatprep.subr.mxu0 0.0
    %1773 = vmatpush2.msra.mxu0 0.0
    %1774 = vmatprep.subr.mxu0 0.0
    %1775 = vmatpush2.msra.mxu0 0.0
    %1776 = vmatprep.subr.mxu0 0.0
    %1777 = vmatpush2.msra.mxu0 0.0
    %1778 = vmatprep.subr.mxu0 0.0
    %1779 = vmatpush2.msra.mxu0 0.0
    %1780 = vmatprep.subr.mxu0 0.0
    %1781 = vmatpush2.msra.mxu0 0.0
    %1782 = vmatprep.subr.mxu0 0.0
    %1783 = vmatpush2.msra.mxu0 0.0
    %1784 = vmatprep.subr.mxu0 0.0
    %1785 = vmatpush2.msra.mxu0 0.0
    %1786 = vmatprep.mubr.f32.mxu0 0.0
    %1787 = vmatmul.mubr.f32.gmra.mxu0 %v1424
    %v1788 = vpop.f32.mrf.mxu0
    %v1789 = vadd.f32 0.0, %v1788
    %v1790 = vpop.f32.mrf.mxu0
    %1791 = vdwg.mxu0
    %1792 = vmatprep.subr.mxu0 0.0
    %1793 = vmatpush1.msra.mxu0 %v1517
    %1794 = vmatprep.subr.mxu0 0.0
    %1795 = vmatpush1.msra.mxu0 %v1516
    %1796 = vmatprep.subr.mxu0 0.0
    %1797 = vmatpush1.msra.mxu0 %v1515
    %1798 = vmatprep.subr.mxu0 0.0
    %1799 = vmatpush1.msra.mxu0 %v1514
    %1800 = vmatprep.subr.mxu0 0.0
    %1801 = vmatpush1.msra.mxu0 %v1513
    %1802 = vmatprep.subr.mxu0 0.0
    %1803 = vmatpush1.msra.mxu0 %v1512
    %1804 = vmatprep.subr.mxu0 0.0
    %1805 = vmatpush1.msra.mxu0 %v1511
    %1806 = vmatprep.subr.mxu0 0.0
    %1807 = vmatpush1.msra.mxu0 %v1510
    %1808 = vmatprep.subr.mxu0 0.0
    %1809 = vmatpush1.msra.mxu0 %v1509
    %1810 = vmatprep.subr.mxu0 0.0
    %1811 = vmatpush1.msra.mxu0 %v1508
    %1812 = vmatprep.subr.mxu0 0.0
    %1813 = vmatpush1.msra.mxu0 %v1507
    %1814 = vmatprep.subr.mxu0 0.0
    %1815 = vmatpush1.msra.mxu0 %v1506
    %1816 = vmatprep.subr.mxu0 0.0
    %1817 = vmatpush1.msra.mxu0 %v1505
    %1818 = vmatprep.subr.mxu0 0.0
    %1819 = vmatpush1.msra.mxu0 %v1504
    %1820 = vmatprep.subr.mxu0 0.0
    %1821 = vmatpush1.msra.mxu0 %v1503
    %1822 = vmatprep.subr.mxu0 0.0
    %1823 = vmatpush1.msra.mxu0 %v1502
    %1824 = vmatprep.subr.mxu0 0.0
    %1825 = vmatpush2.msra.mxu0 0.0
    %1826 = vmatprep.subr.mxu0 0.0
    %1827 = vmatpush2.msra.mxu0 0.0
    %1828 = vmatprep.subr.mxu0 0.0
    %1829 = vmatpush2.msra.mxu0 0.0
    %1830 = vmatprep.subr.mxu0 0.0
    %1831 = vmatpush2.msra.mxu0 0.0
    %1832 = vmatprep.subr.mxu0 0.0
    %1833 = vmatpush2.msra.mxu0 0.0
    %1834 = vmatprep.subr.mxu0 0.0
    %1835 = vmatpush2.msra.mxu0 0.0
    %1836 = vmatprep.subr.mxu0 0.0
    %1837 = vmatpush2.msra.mxu0 0.0
    %1838 = vmatprep.subr.mxu0 0.0
    %1839 = vmatpush2.msra.mxu0 0.0
    %1840 = vmatprep.subr.mxu0 0.0
    %1841 = vmatpush2.msra.mxu0 0.0
    %1842 = vmatprep.subr.mxu0 0.0
    %1843 = vmatpush2.msra.mxu0 0.0
    %1844 = vmatprep.subr.mxu0 0.0
    %1845 = vmatpush2.msra.mxu0 0.0
    %1846 = vmatprep.subr.mxu0 0.0
    %1847 = vmatpush2.msra.mxu0 0.0
    %1848 = vmatprep.subr.mxu0 0.0
    %1849 = vmatpush2.msra.mxu0 0.0
    %1850 = vmatprep.subr.mxu0 0.0
    %1851 = vmatpush2.msra.mxu0 0.0
    %1852 = vmatprep.subr.mxu0 0.0
    %1853 = vmatpush2.msra.mxu0 0.0
    %1854 = vmatprep.subr.mxu0 0.0
    %1855 = vmatpush2.msra.mxu0 0.0
    %1856 = vmatprep.mubr.f32.mxu0 0.0
    %1857 = vmatmul.mubr.f32.gmra.mxu0 %v1425
    %v1858 = vpop.f32.mrf.mxu0
    %v1859 = vadd.f32 0.0, %v1858
    %v1860 = vpop.f32.mrf.mxu0
    %1861 = vdwg.mxu0
    %1862 = vmatprep.subr.mxu0 0.0
    %1863 = vmatpush1.msra.mxu0 %v1533
    %1864 = vmatprep.subr.mxu0 0.0
    %1865 = vmatpush1.msra.mxu0 %v1532
    %1866 = vmatprep.subr.mxu0 0.0
    %1867 = vmatpush1.msra.mxu0 %v1531
    %1868 = vmatprep.subr.mxu0 0.0
    %1869 = vmatpush1.msra.mxu0 %v1530
    %1870 = vmatprep.subr.mxu0 0.0
    %1871 = vmatpush1.msra.mxu0 %v1529
    %1872 = vmatprep.subr.mxu0 0.0
    %1873 = vmatpush1.msra.mxu0 %v1528
    %1874 = vmatprep.subr.mxu0 0.0
    %1875 = vmatpush1.msra.mxu0 %v1527
    %1876 = vmatprep.subr.mxu0 0.0
    %1877 = vmatpush1.msra.mxu0 %v1526
    %1878 = vmatprep.subr.mxu0 0.0
    %1879 = vmatpush1.msra.mxu0 %v1525
    %1880 = vmatprep.subr.mxu0 0.0
    %1881 = vmatpush1.msra.mxu0 %v1524
    %1882 = vmatprep.subr.mxu0 0.0
    %1883 = vmatpush1.msra.mxu0 %v1523
    %1884 = vmatprep.subr.mxu0 0.0
    %1885 = vmatpush1.msra.mxu0 %v1522
    %1886 = vmatprep.subr.mxu0 0.0
    %1887 = vmatpush1.msra.mxu0 %v1521
    %1888 = vmatprep.subr.mxu0 0.0
    %1889 = vmatpush1.msra.mxu0 %v1520
    %1890 = vmatprep.subr.mxu0 0.0
    %1891 = vmatpush1.msra.mxu0 %v1519
    %1892 = vmatprep.subr.mxu0 0.0
    %1893 = vmatpush1.msra.mxu0 %v1518
    %1894 = vmatprep.subr.mxu0 0.0
    %1895 = vmatpush2.msra.mxu0 0.0
    %1896 = vmatprep.subr.mxu0 0.0
    %1897 = vmatpush2.msra.mxu0 0.0
    %1898 = vmatprep.subr.mxu0 0.0
    %1899 = vmatpush2.msra.mxu0 0.0
    %1900 = vmatprep.subr.mxu0 0.0
    %1901 = vmatpush2.msra.mxu0 0.0
    %1902 = vmatprep.subr.mxu0 0.0
    %1903 = vmatpush2.msra.mxu0 0.0
    %1904 = vmatprep.subr.mxu0 0.0
    %1905 = vmatpush2.msra.mxu0 0.0
    %1906 = vmatprep.subr.mxu0 0.0
    %1907 = vmatpush2.msra.mxu0 0.0
    %1908 = vmatprep.subr.mxu0 0.0
    %1909 = vmatpush2.msra.mxu0 0.0
    %1910 = vmatprep.subr.mxu0 0.0
    %1911 = vmatpush2.msra.mxu0 0.0
    %1912 = vmatprep.subr.mxu0 0.0
    %1913 = vmatpush2.msra.mxu0 0.0
    %1914 = vmatprep.subr.mxu0 0.0
    %1915 = vmatpush2.msra.mxu0 0.0
    %1916 = vmatprep.subr.mxu0 0.0
    %1917 = vmatpush2.msra.mxu0 0.0
    %1918 = vmatprep.subr.mxu0 0.0
    %1919 = vmatpush2.msra.mxu0 0.0
    %1920 = vmatprep.subr.mxu0 0.0
    %1921 = vmatpush2.msra.mxu0 0.0
    %1922 = vmatprep.subr.mxu0 0.0
    %1923 = vmatpush2.msra.mxu0 0.0
    %1924 = vmatprep.subr.mxu0 0.0
    %1925 = vmatpush2.msra.mxu0 0.0
    %1926 = vmatprep.mubr.f32.mxu0 0.0
    %1927 = vmatmul.mubr.f32.gmra.mxu0 %v1426
    %v1928 = vpop.f32.mrf.mxu0
    %v1929 = vadd.f32 0.0, %v1928
    %v1930 = vpop.f32.mrf.mxu0
    %1931 = vdwg.mxu0
    %1932 = vmatprep.subr.mxu0 0.0
    %1933 = vmatpush1.msra.mxu0 %v1549
    %1934 = vmatprep.subr.mxu0 0.0
    %1935 = vmatpush1.msra.mxu0 %v1548
    %1936 = vmatprep.subr.mxu0 0.0
    %1937 = vmatpush1.msra.mxu0 %v1547
    %1938 = vmatprep.subr.mxu0 0.0
    %1939 = vmatpush1.msra.mxu0 %v1546
    %1940 = vmatprep.subr.mxu0 0.0
    %1941 = vmatpush1.msra.mxu0 %v1545
    %1942 = vmatprep.subr.mxu0 0.0
    %1943 = vmatpush1.msra.mxu0 %v1544
    %1944 = vmatprep.subr.mxu0 0.0
    %1945 = vmatpush1.msra.mxu0 %v1543
    %1946 = vmatprep.subr.mxu0 0.0
    %1947 = vmatpush1.msra.mxu0 %v1542
    %1948 = vmatprep.subr.mxu0 0.0
    %1949 = vmatpush1.msra.mxu0 %v1541
    %1950 = vmatprep.subr.mxu0 0.0
    %1951 = vmatpush1.msra.mxu0 %v1540
    %1952 = vmatprep.subr.mxu0 0.0
    %1953 = vmatpush1.msra.mxu0 %v1539
    %1954 = vmatprep.subr.mxu0 0.0
    %1955 = vmatpush1.msra.mxu0 %v1538
    %1956 = vmatprep.subr.mxu0 0.0
    %1957 = vmatpush1.msra.mxu0 %v1537
    %1958 = vmatprep.subr.mxu0 0.0
    %1959 = vmatpush1.msra.mxu0 %v1536
    %1960 = vmatprep.subr.mxu0 0.0
    %1961 = vmatpush1.msra.mxu0 %v1535
    %1962 = vmatprep.subr.mxu0 0.0
    %1963 = vmatpush1.msra.mxu0 %v1534
    %1964 = vmatprep.subr.mxu0 0.0
    %1965 = vmatpush2.msra.mxu0 0.0
    %1966 = vmatprep.subr.mxu0 0.0
    %1967 = vmatpush2.msra.mxu0 0.0
    %1968 = vmatprep.subr.mxu0 0.0
    %1969 = vmatpush2.msra.mxu0 0.0
    %1970 = vmatprep.subr.mxu0 0.0
    %1971 = vmatpush2.msra.mxu0 0.0
    %1972 = vmatprep.subr.mxu0 0.0
    %1973 = vmatpush2.msra.mxu0 0.0
    %1974 = vmatprep.subr.mxu0 0.0
    %1975 = vmatpush2.msra.mxu0 0.0
    %1976 = vmatprep.subr.mxu0 0.0
    %1977 = vmatpush2.msra.mxu0 0.0
    %1978 = vmatprep.subr.mxu0 0.0
    %1979 = vmatpush2.msra.mxu0 0.0
    %1980 = vmatprep.subr.mxu0 0.0
    %1981 = vmatpush2.msra.mxu0 0.0
    %1982 = vmatprep.subr.mxu0 0.0
    %1983 = vmatpush2.msra.mxu0 0.0
    %1984 = vmatprep.subr.mxu0 0.0
    %1985 = vmatpush2.msra.mxu0 0.0
    %1986 = vmatprep.subr.mxu0 0.0
    %1987 = vmatpush2.msra.mxu0 0.0
    %1988 = vmatprep.subr.mxu0 0.0
    %1989 = vmatpush2.msra.mxu0 0.0
    %1990 = vmatprep.subr.mxu0 0.0
    %1991 = vmatpush2.msra.mxu0 0.0
    %1992 = vmatprep.subr.mxu0 0.0
    %1993 = vmatpush2.msra.mxu0 0.0
    %1994 = vmatprep.subr.mxu0 0.0
    %1995 = vmatpush2.msra.mxu0 0.0
    %1996 = vmatprep.mubr.f32.mxu0 0.0
    %1997 = vmatmul.mubr.f32.gmra.mxu0 %v1427
    %v1998 = vpop.f32.mrf.mxu0
    %v1999 = vadd.f32 0.0, %v1998
    %v2000 = vpop.f32.mrf.mxu0
    %2001 = vdwg.mxu0
    %2002 = vmatprep.subr.mxu0 0.0
    %2003 = vmatpush1.msra.mxu0 %v1565
    %2004 = vmatprep.subr.mxu0 0.0
    %2005 = vmatpush1.msra.mxu0 %v1564
    %2006 = vmatprep.subr.mxu0 0.0
    %2007 = vmatpush1.msra.mxu0 %v1563
    %2008 = vmatprep.subr.mxu0 0.0
    %2009 = vmatpush1.msra.mxu0 %v1562
    %2010 = vmatprep.subr.mxu0 0.0
    %2011 = vmatpush1.msra.mxu0 %v1561
    %2012 = vmatprep.subr.mxu0 0.0
    %2013 = vmatpush1.msra.mxu0 %v1560
    %2014 = vmatprep.subr.mxu0 0.0
    %2015 = vmatpush1.msra.mxu0 %v1559
    %2016 = vmatprep.subr.mxu0 0.0
    %2017 = vmatpush1.msra.mxu0 %v1558
    %2018 = vmatprep.subr.mxu0 0.0
    %2019 = vmatpush1.msra.mxu0 %v1557
    %2020 = vmatprep.subr.mxu0 0.0
    %2021 = vmatpush1.msra.mxu0 %v1556
    %2022 = vmatprep.subr.mxu0 0.0
    %2023 = vmatpush1.msra.mxu0 %v1555
    %2024 = vmatprep.subr.mxu0 0.0
    %2025 = vmatpush1.msra.mxu0 %v1554
    %2026 = vmatprep.subr.mxu0 0.0
    %2027 = vmatpush1.msra.mxu0 %v1553
    %2028 = vmatprep.subr.mxu0 0.0
    %2029 = vmatpush1.msra.mxu0 %v1552
    %2030 = vmatprep.subr.mxu0 0.0
    %2031 = vmatpush1.msra.mxu0 %v1551
    %2032 = vmatprep.subr.mxu0 0.0
    %2033 = vmatpush1.msra.mxu0 %v1550
    %2034 = vmatprep.subr.mxu0 0.0
    %2035 = vmatpush2.msra.mxu0 0.0
    %2036 = vmatprep.subr.mxu0 0.0
    %2037 = vmatpush2.msra.mxu0 0.0
    %2038 = vmatprep.subr.mxu0 0.0
    %2039 = vmatpush2.msra.mxu0 0.0
    %2040 = vmatprep.subr.mxu0 0.0
    %2041 = vmatpush2.msra.mxu0 0.0
    %2042 = vmatprep.subr.mxu0 0.0
    %2043 = vmatpush2.msra.mxu0 0.0
    %2044 = vmatprep.subr.mxu0 0.0
    %2045 = vmatpush2.msra.mxu0 0.0
    %2046 = vmatprep.subr.mxu0 0.0
    %2047 = vmatpush2.msra.mxu0 0.0
    %2048 = vmatprep.subr.mxu0 0.0
    %2049 = vmatpush2.msra.mxu0 0.0
    %2050 = vmatprep.subr.mxu0 0.0
    %2051 = vmatpush2.msra.mxu0 0.0
    %2052 = vmatprep.subr.mxu0 0.0
    %2053 = vmatpush2.msra.mxu0 0.0
    %2054 = vmatprep.subr.mxu0 0.0
    %2055 = vmatpush2.msra.mxu0 0.0
    %2056 = vmatprep.subr.mxu0 0.0
    %2057 = vmatpush2.msra.mxu0 0.0
    %2058 = vmatprep.subr.mxu0 0.0
    %2059 = vmatpush2.msra.mxu0 0.0
    %2060 = vmatprep.subr.mxu0 0.0
    %2061 = vmatpush2.msra.mxu0 0.0
    %2062 = vmatprep.subr.mxu0 0.0
    %2063 = vmatpush2.msra.mxu0 0.0
    %2064 = vmatprep.subr.mxu0 0.0
    %2065 = vmatpush2.msra.mxu0 0.0
    %2066 = vmatprep.mubr.f32.mxu0 0.0
    %2067 = vmatmul.mubr.f32.gmra.mxu0 %v1428
    %v2068 = vpop.f32.mrf.mxu0
    %v2069 = vadd.f32 0.0, %v2068
    %v2070 = vpop.f32.mrf.mxu0
    %2071 = vdwg.mxu0
    %2072 = vmatprep.subr.mxu0 0.0
    %2073 = vmatpush1.msra.mxu0 %v1581
    %2074 = vmatprep.subr.mxu0 0.0
    %2075 = vmatpush1.msra.mxu0 %v1580
    %2076 = vmatprep.subr.mxu0 0.0
    %2077 = vmatpush1.msra.mxu0 %v1579
    %2078 = vmatprep.subr.mxu0 0.0
    %2079 = vmatpush1.msra.mxu0 %v1578
    %2080 = vmatprep.subr.mxu0 0.0
    %2081 = vmatpush1.msra.mxu0 %v1577
    %2082 = vmatprep.subr.mxu0 0.0
    %2083 = vmatpush1.msra.mxu0 %v1576
    %2084 = vmatprep.subr.mxu0 0.0
    %2085 = vmatpush1.msra.mxu0 %v1575
    %2086 = vmatprep.subr.mxu0 0.0
    %2087 = vmatpush1.msra.mxu0 %v1574
    %2088 = vmatprep.subr.mxu0 0.0
    %2089 = vmatpush1.msra.mxu0 %v1573
    %2090 = vmatprep.subr.mxu0 0.0
    %2091 = vmatpush1.msra.mxu0 %v1572
    %2092 = vmatprep.subr.mxu0 0.0
    %2093 = vmatpush1.msra.mxu0 %v1571
    %2094 = vmatprep.subr.mxu0 0.0
    %2095 = vmatpush1.msra.mxu0 %v1570
    %2096 = vmatprep.subr.mxu0 0.0
    %2097 = vmatpush1.msra.mxu0 %v1569
    %2098 = vmatprep.subr.mxu0 0.0
    %2099 = vmatpush1.msra.mxu0 %v1568
    %2100 = vmatprep.subr.mxu0 0.0
    %2101 = vmatpush1.msra.mxu0 %v1567
    %2102 = vmatprep.subr.mxu0 0.0
    %2103 = vmatpush1.msra.mxu0 %v1566
    %2104 = vmatprep.subr.mxu0 0.0
    %2105 = vmatpush2.msra.mxu0 0.0
    %2106 = vmatprep.subr.mxu0 0.0
    %2107 = vmatpush2.msra.mxu0 0.0
    %2108 = vmatprep.subr.mxu0 0.0
    %2109 = vmatpush2.msra.mxu0 0.0
    %2110 = vmatprep.subr.mxu0 0.0
    %2111 = vmatpush2.msra.mxu0 0.0
    %2112 = vmatprep.subr.mxu0 0.0
    %2113 = vmatpush2.msra.mxu0 0.0
    %2114 = vmatprep.subr.mxu0 0.0
    %2115 = vmatpush2.msra.mxu0 0.0
    %2116 = vmatprep.subr.mxu0 0.0
    %2117 = vmatpush2.msra.mxu0 0.0
    %2118 = vmatprep.subr.mxu0 0.0
    %2119 = vmatpush2.msra.mxu0 0.0
    %2120 = vmatprep.subr.mxu0 0.0
    %2121 = vmatpush2.msra.mxu0 0.0
    %2122 = vmatprep.subr.mxu0 0.0
    %2123 = vmatpush2.msra.mxu0 0.0
    %2124 = vmatprep.subr.mxu0 0.0
    %2125 = vmatpush2.msra.mxu0 0.0
    %2126 = vmatprep.subr.mxu0 0.0
    %2127 = vmatpush2.msra.mxu0 0.0
    %2128 = vmatprep.subr.mxu0 0.0
    %2129 = vmatpush2.msra.mxu0 0.0
    %2130 = vmatprep.subr.mxu0 0.0
    %2131 = vmatpush2.msra.mxu0 0.0
    %2132 = vmatprep.subr.mxu0 0.0
    %2133 = vmatpush2.msra.mxu0 0.0
    %2134 = vmatprep.subr.mxu0 0.0
    %2135 = vmatpush2.msra.mxu0 0.0
    %2136 = vmatprep.mubr.f32.mxu0 0.0
    %2137 = vmatmul.mubr.f32.gmra.mxu0 %v1429
    %v2138 = vpop.f32.mrf.mxu0
    %v2139 = vadd.f32 0.0, %v2138
    %v2140 = vpop.f32.mrf.mxu0
    %2141 = vdwg.mxu0
    %v2150 = vrot.slane %v1719, 7
    %v2151 = vsel %vm1314, %v2150, %v1649
    %v2152 = vrot.slane %v1789, 6
    %v2153 = vsel %vm1317, %v2152, %v2151
    %v2154 = vrot.slane %v1859, 5
    %v2155 = vsel %vm1320, %v2154, %v2153
    %v2156 = vrot.slane %v1929, 4
    %v2157 = vsel %vm1323, %v2156, %v2155
    %v2158 = vrot.slane %v1999, 3
    %v2159 = vsel %vm1326, %v2158, %v2157
    %v2160 = vrot.slane %v2069, 2
    %v2161 = vsel %vm1329, %v2160, %v2159
    %v2162 = vrot.slane %v2139, 1
    %v2163 = vsel %vm1332, %v2162, %v2161
    %vm2165 = vcmask 261120
    %2166 = vst.msk [vmem:[#allocation5] sm:$0xff] %vm2165, %v2163
    // Predicated region
    $region34: #{_lambda_.1} parent=1 // pred_check
      _
    $region35: #{_lambda_.1} parent=1 // pred_check_branch
      %2168 = sbr.rel (0) target = $region37
    $region36: #{_lambda_.1} parent=1 // pred_region
      %s2170 = ssub.s32 128, 128
      %2171 = vsyncadd [#allocation4], %s2170
      %s2173 = sshll.u32 [#allocation5], 4
      %s2174 = int_to_ptr.vmem [resolvable:$true] %s2173
      %2176 = dma.vmem_to_hbm [thread:$0]  %s2174, 128, %s7, [#allocation4]
    $region37: #{_lambda_.1} parent=1 // pred_fallthru
      _
    // Predicated region
    $region38: #{_lambda_.1} parent=1 // pred_check
      _
    $region39: #{_lambda_.1} parent=1 // pred_check_branch
      %2178 = sbr.rel (0) target = $region41
    $region40: #{_lambda_.1} parent=1 // pred_region
      %s2180 = ssub.s32 128, 128
      %2181 = vsyncadd [#allocation7], %s2180
      %s2183 = sshll.u32 [#allocation6], 4
      %s2184 = int_to_ptr.vmem [resolvable:$true] %s2183
      %2186 = dma.vmem_to_hbm [thread:$0]  %s2184, 128, %s8, [#allocation7]
    $region41: #{_lambda_.1} parent=1 // pred_fallthru
      _
    // Predicated region
    $region42: #{_lambda_.1} parent=1 // pred_check
      _
    $region43: #{_lambda_.1} parent=1 // pred_check_branch
      %2188 = sbr.rel (0) target = $region45
    $region44: #{_lambda_.1} parent=1 // pred_region
      %2189 = dma.done [#allocation4], 128
    $region45: #{_lambda_.1} parent=1 // pred_fallthru
      _
    // Predicated region
    $region46: #{_lambda_.1} parent=1 // pred_check
      _
    $region47: #{_lambda_.1} parent=1 // pred_check_branch
      %2191 = sbr.rel (0) target = $region49
    $region48: #{_lambda_.1} parent=1 // pred_region
      %2192 = dma.done [#allocation7], 128
    $region49: #{_lambda_.1} parent=1 // pred_fallthru
      _
    %2193 = vsyncpa [#allocation3], 1
    %2194 = vsyncpa [#allocation4], 1
    %2195 = vsyncpa [#allocation7], 1

</llo_original>
